<compile_context>
chip_gen: v7x
topology: tpu7x:2x2x1
jax: 0.10.0
libtpu: 0.0.40
codegen_flags: <defaults>
</compile_context>

<pallas_src>
import jax
import jax.numpy as jnp
from jax.experimental import pallas as pl
from jax.experimental.pallas import tpu as pltpu


# ----------------------------------------------------------------------------
# sizing helpers
# ----------------------------------------------------------------------------
def _vmem_limit_bytes():
    cap = 128 << 20
    try:
        cap = int(pltpu.get_tpu_info().vmem_capacity_bytes)
    except Exception:
        # Capacity query only (not a kernel error path): fall back to the
        # v5e/v6e capacity on older jax versions without get_tpu_info.
        pass
    # Leave headroom for compiler-internal scratch: ~78% of physical capacity,
    # capped at 100 MiB (=> ~50 MiB on v7x, ~100 MiB on v5e/v6e).
    return min(int(cap * 0.78), 100 << 20)


def _choose_tb(B, L, D, vmem_limit_bytes, param_bytes):
    """Batch-tile size and tile count from a VMEM budget that counts the f32
    in-kernel intermediates, not just the streamed blocks."""
    # Per batch row inside one grid step (f32 bytes):
    #   seq stream block, double-buffered : 2 * L * D * 4
    #   q1 / sigmoid-arg / s slabs        : 3 * L * D * 4
    #   small (., D)/(., L) tensors       : ~64 * D * 4 + 16 * L * 4
    per_row = (5 * L * D + 64 * D + 16 * L) * 4
    budget = int(vmem_limit_bytes * 0.55) - param_bytes
    tb = max(8, min(256, budget // max(per_row, 1)))
    tb = max(8, (tb // 8) * 8)
    if tb >= B:
        return B, 1                      # single full-batch tile (always legal)
    n = -(-B // tb)
    if n > 1 and (n % 2) == 1:
        # Best-effort: prefer an even tile count so the "parallel" batch axis
        # splits evenly across v7x's two TensorCores.
        tb2 = max(8, ((-(-B // (n + 1)) + 7) // 8) * 8)
        tb, n = tb2, -(-B // tb2)
    return tb, n


def _replicated_spec(shape, single_buffer):
    """Grid-invariant parameter block (constant index_map).  Single buffering is
    requested only for large parameter sets; the fallback is narrowed to
    constructing the BlockSpec so real errors from pallas_call still surface."""
    zero = lambda b: (0,) * len(shape)
    if single_buffer:
        try:
            return pl.BlockSpec(shape, zero, pipeline_mode=pl.Buffered(1))
        except (TypeError, ValueError):   # older jax without pipeline_mode
            pass
    return pl.BlockSpec(shape, zero)


# ----------------------------------------------------------------------------
# kernel
# ----------------------------------------------------------------------------
def _seq_affinity_kernel(
    mask_ref, short_ref, seq_ref, aff_ref,
    w1_ref, b1_ref, w2f2_ref, b2f2_ref, w3f3_ref, b3f3_ref, wa_ref,
    wf1_ref, bf1_ref, wff_ref, bff_ref,
    out_ref,
):
    tb, l, d = seq_ref.shape
    f32 = jnp.float32

    seq = seq_ref[...].astype(f32)        # (TB, L, D)
    short = short_ref[...]                # (TB, D)
    aff = aff_ref[...]                    # (TB, D)

    # ---- linear_1(seq): fold batch*seq into the MXU M dimension -------------
    q1 = jnp.dot(seq.reshape(tb * l, d), w1_ref[...],
                 preferred_element_type=f32) + b1_ref[...]
    q1 = q1.reshape(tb, l, d)

    # ---- fused (linear_2 | fusion.linear2) and (linear_3 | fusion.linear3) --
    qf2 = jnp.dot(short, w2f2_ref[...], preferred_element_type=f32) + b2f2_ref[...]
    qf3 = jnp.dot(aff, w3f3_ref[...], preferred_element_type=f32) + b3f3_ref[...]
    q2, f2 = qf2[:, :d], qf2[:, d:]
    q3, f3 = qf3[:, :d], qf3[:, d:]

    # ---- soft attention over the sequence ------------------------------------
    # s = sigmoid(q1 + q2 + q3); the mask is applied to alpha afterwards
    # (exact: linear_alpha has no bias and the mask is constant over D), which
    # removes the full (TB, L, D) masked multiply of the previous version.
    s = jax.nn.sigmoid(q1 + q2[:, None, :] + q3[:, None, :])          # (TB, L, D)

    # alpha[b,1,l] = sum_d s[b,l,d] * wa[d]   -> batched MXU matmul (N-slack)
    wa_b = jnp.broadcast_to(wa_ref[...], (tb, 1, d))                  # (TB, 1, D)
    alpha = jnp.einsum('bqd,bld->bql', wa_b, s,
                       preferred_element_type=f32)                    # (TB, 1, L)
    alpha = alpha * mask_ref[...][:, None, :]                         # fold mask

    # long[b,1,d] = sum_l alpha[b,1,l] * seq[b,l,d]  -> batched MXU matmul
    long_feat = jnp.einsum('bql,bld->bqd', alpha, seq,
                           preferred_element_type=f32).reshape(tb, d)  # (TB, D)

    # ---- fusion_triple_feature ------------------------------------------------
    f1 = jnp.dot(long_feat, wf1_ref[...], preferred_element_type=f32) + bf1_ref[...]

    # softmax over the 3 stacked features (torch dim=1), elementwise per lane.
    m = jnp.maximum(jnp.maximum(f1, f2), f3)
    e1 = jnp.exp(f1 - m)
    e2 = jnp.exp(f2 - m)
    e3 = jnp.exp(f3 - m)
    inv = pl.reciprocal(e1 + e2 + e3, approx=True)    # EUP slot, ~2^-12 rel err
    fused = (e1 * f1 + e2 * f2 + e3 * f3) * inv       # (TB, D)

    out = jnp.dot(fused, wff_ref[...], preferred_element_type=f32) + bff_ref[...]
    out_ref[...] = out.astype(out_ref.dtype)


# ----------------------------------------------------------------------------
# wrapper
# ----------------------------------------------------------------------------
def seq_affinity_soft_attention_pallas(mask, short_feature, seq_feature,
                                       affinity_feature, params, *, tb=None):
    B, L, D = seq_feature.shape
    f32 = jnp.float32

    # Mask arrives (B, L, 1) (torch layout) or (B, L); stream it 2-D so the
    # VMEM block is lane-dense in L (a (., ., 1) block pads its lane dim 1->128).
    mask2d = mask.reshape(B, L).astype(f32)

    # Parameters (small, reused across the whole grid).  In production these
    # fused/reshaped views would be prepared once, outside the hot path.
    def b2d(b):
        return b.astype(f32).reshape(1, D)

    w1, b1 = params["w1"].astype(f32), b2d(params["b1"])
    wf1, bf1 = params["wf1"].astype(f32), b2d(params["bf1"])
    wff, bff = params["wff"].astype(f32), b2d(params["bff"])
    w2f2 = jnp.concatenate([params["w2"], params["wf2"]], axis=1).astype(f32)
    b2f2 = jnp.concatenate([b2d(params["b2"]), b2d(params["bf2"])], axis=1)
    w3f3 = jnp.concatenate([params["w3"], params["wf3"]], axis=1).astype(f32)
    b3f3 = jnp.concatenate([b2d(params["b3"]), b2d(params["bf3"])], axis=1)
    wa = params["wa"].astype(f32).reshape(1, 1, D)

    param_list = [w1, b1, w2f2, b2f2, w3f3, b3f3, wa, wf1, bf1, wff, bff]
    param_bytes = sum(int(p.size) * p.dtype.itemsize for p in param_list)

    vmem_limit = _vmem_limit_bytes()
    if tb is None:
        tb, n_tiles = _choose_tb(B, L, D, vmem_limit, param_bytes)
    else:
        n_tiles = -(-B // tb)

    data_specs = [
        pl.BlockSpec((tb, L), lambda b: (b, 0)),         # mask (2-D, lane = L)
        pl.BlockSpec((tb, D), lambda b: (b, 0)),         # short_feature
        pl.BlockSpec((tb, L, D), lambda b: (b, 0, 0)),   # seq_feature
        pl.BlockSpec((tb, D), lambda b: (b, 0)),         # affinity_feature
    ]
    single_buffer = param_bytes > (2 << 20)
    param_specs = [_replicated_spec(p.shape, single_buffer) for p in param_list]

    out = pl.pallas_call(
        _seq_affinity_kernel,
        out_shape=jax.ShapeDtypeStruct((B, D), seq_feature.dtype),
        grid_spec=pltpu.PrefetchScalarGridSpec(
            num_scalar_prefetch=0,
            grid=(n_tiles,),
            in_specs=data_specs + param_specs,
            out_specs=pl.BlockSpec((tb, D), lambda b: (b, 0)),
        ),
        compiler_params=pltpu.CompilerParams(
            dimension_semantics=("parallel",),
            vmem_limit_bytes=vmem_limit,
        ),
    )(mask2d, short_feature, seq_feature, affinity_feature, *param_list)
    return out


# ----------------------------------------------------------------------------
# pure-JAX reference (mirrors the PyTorch forward in f32)
# ----------------------------------------------------------------------------
def _reference(mask, short, seq, aff, p):
    mask = mask.reshape(seq.shape[0], seq.shape[1], 1).astype(jnp.float32)
    q1 = seq @ p["w1"] + p["b1"]
    q2 = short @ p["w2"] + p["b2"]
    q3 = aff @ p["w3"] + p["b3"]
    h = mask * jax.nn.sigmoid(q1 + q2[:, None, :] + q3[:, None, :])
    alpha = h @ p["wa"].T                                # (B, L, 1)
    long_feat = jnp.sum(alpha * seq, axis=1)             # (B, D)
    f1 = long_feat @ p["wf1"] + p["bf1"]
    f2 = short @ p["wf2"] + p["bf2"]
    f3 = aff @ p["wf3"] + p["bf3"]
    fus = jnp.stack([f1, f2, f3], axis=1)                # (B, 3, D)
    attn = jax.nn.softmax(fus, axis=1)
    fused = jnp.sum(attn * fus, axis=1)
    return fused @ p["wff"] + p["bff"]


def init_params(key, emb_dim):
    """Deterministic synthetic parameters. Weights stored as (D_in, D_out)
    (the transpose of torch's nn.Linear.weight)."""
    names_w = ["w1", "w2", "w3", "wf1", "wf2", "wf3", "wff"]
    names_b = ["b1", "b2", "b3", "bf1", "bf2", "bf3", "bff"]
    keys = jax.random.split(key, len(names_w) + 1)
    p = {}
    scale = 1.0 / jnp.sqrt(emb_dim).astype(jnp.float32)
    for k, n in zip(keys[:-1], names_w):
        p[n] = jax.random.normal(k, (emb_dim, emb_dim), jnp.float32) * scale
    for i, n in enumerate(names_b):
        p[n] = jnp.full((1, emb_dim), 0.01 * (i + 1), jnp.float32)
    # linear_alpha: Linear(emb_dim, 1, bias=False) -> weight (1, emb_dim)
    p["wa"] = jax.random.normal(keys[-1], (1, emb_dim), jnp.float32) * scale
    return p


if __name__ == "__main__":
    B, L, D = 2, 8, 32
    key = jax.random.PRNGKey(0)
    k_seq, k_short, k_aff, k_mask, k_par = jax.random.split(key, 5)

    seq_feature = jax.random.normal(k_seq, (B, L, D), jnp.float32)
    short_feature = jax.random.normal(k_short, (B, D), jnp.float32)
    affinity_feature = jax.random.normal(k_aff, (B, D), jnp.float32)
    mask = (jax.random.uniform(k_mask, (B, L, 1)) > 0.3).astype(jnp.float32)

    params = init_params(k_par, D)

    out = seq_affinity_soft_attention_pallas(
        mask, short_feature, seq_feature, affinity_feature, params)
    out = jax.block_until_ready(out)

    ref = _reference(mask, short_feature, seq_feature, affinity_feature, params)
    assert out.shape == (B, D)
    # f32 math throughout; differences are accumulation order and the
    # approximate EUP reciprocal in the 3-way softmax.
    assert jnp.allclose(out, ref, atol=5e-3, rtol=5e-3), "mismatch vs reference"
    print("KERNEL_OK")
</pallas_src>

<mosaic_0001>
module attributes {stable_mosaic.version = 11 : i64} {
  func.func @_seq_affinity_kernel(%arg0: i32, %arg1: memref<2x8xf32, #tpu.memory_space<vmem>>, %arg2: memref<2x32xf32, #tpu.memory_space<vmem>>, %arg3: memref<2x8x32xf32, #tpu.memory_space<vmem>>, %arg4: memref<2x32xf32, #tpu.memory_space<vmem>>, %arg5: memref<32x32xf32, #tpu.memory_space<vmem>>, %arg6: memref<1x32xf32, #tpu.memory_space<vmem>>, %arg7: memref<32x64xf32, #tpu.memory_space<vmem>>, %arg8: memref<1x64xf32, #tpu.memory_space<vmem>>, %arg9: memref<32x64xf32, #tpu.memory_space<vmem>>, %arg10: memref<1x64xf32, #tpu.memory_space<vmem>>, %arg11: memref<1x1x32xf32, #tpu.memory_space<vmem>>, %arg12: memref<32x32xf32, #tpu.memory_space<vmem>>, %arg13: memref<1x32xf32, #tpu.memory_space<vmem>>, %arg14: memref<32x32xf32, #tpu.memory_space<vmem>>, %arg15: memref<1x32xf32, #tpu.memory_space<vmem>>, %arg16: memref<2x32xf32, #tpu.memory_space<vmem>>) attributes {dimension_semantics = [#tpu.dimension_semantics<parallel>], iteration_bounds = array<i64: 1>, scalar_prefetch = 0 : i64, scratch_operands = 0 : i64, tpu.core_type = #tpu.core_type<tc>, window_params = [{transform_indices = @transform_0, window_bounds = array<i64: 2, 8>}, {transform_indices = @transform_1, window_bounds = array<i64: 2, 32>}, {transform_indices = @transform_2, window_bounds = array<i64: 2, 8, 32>}, {transform_indices = @transform_3, window_bounds = array<i64: 2, 32>}, {pipeline_mode = #tpu.pipeline_mode<synchronous>, transform_indices = @transform_4, window_bounds = array<i64: 32, 32>}, {pipeline_mode = #tpu.pipeline_mode<synchronous>, transform_indices = @transform_5, window_bounds = array<i64: 1, 32>}, {pipeline_mode = #tpu.pipeline_mode<synchronous>, transform_indices = @transform_6, window_bounds = array<i64: 32, 64>}, {pipeline_mode = #tpu.pipeline_mode<synchronous>, transform_indices = @transform_7, window_bounds = array<i64: 1, 64>}, {pipeline_mode = #tpu.pipeline_mode<synchronous>, transform_indices = @transform_8, window_bounds = array<i64: 32, 64>}, {pipeline_mode = #tpu.pipeline_mode<synchronous>, transform_indices = @transform_9, window_bounds = array<i64: 1, 64>}, {pipeline_mode = #tpu.pipeline_mode<synchronous>, transform_indices = @transform_10, window_bounds = array<i64: 1, 1, 32>}, {pipeline_mode = #tpu.pipeline_mode<synchronous>, transform_indices = @transform_11, window_bounds = array<i64: 32, 32>}, {pipeline_mode = #tpu.pipeline_mode<synchronous>, transform_indices = @transform_12, window_bounds = array<i64: 1, 32>}, {pipeline_mode = #tpu.pipeline_mode<synchronous>, transform_indices = @transform_13, window_bounds = array<i64: 32, 32>}, {pipeline_mode = #tpu.pipeline_mode<synchronous>, transform_indices = @transform_14, window_bounds = array<i64: 1, 32>}, {transform_indices = @transform_15, window_bounds = array<i64: 2, 32>}]} {
    %c0 = arith.constant 0 : index
    %c0_0 = arith.constant 0 : index
    %c0_1 = arith.constant 0 : index
    %0 = vector.load %arg3[%c0, %c0_0, %c0_1] : memref<2x8x32xf32, #tpu.memory_space<vmem>>, vector<2x8x32xf32>
    %c0_2 = arith.constant 0 : index
    %c0_3 = arith.constant 0 : index
    %1 = vector.load %arg2[%c0_2, %c0_3] : memref<2x32xf32, #tpu.memory_space<vmem>>, vector<2x32xf32>
    %c0_4 = arith.constant 0 : index
    %c0_5 = arith.constant 0 : index
    %2 = vector.load %arg4[%c0_4, %c0_5] : memref<2x32xf32, #tpu.memory_space<vmem>>, vector<2x32xf32>
    %3 = vector.shape_cast %0 : vector<2x8x32xf32> to vector<16x32xf32>
    %c0_6 = arith.constant 0 : index
    %c0_7 = arith.constant 0 : index
    %4 = vector.load %arg5[%c0_6, %c0_7] : memref<32x32xf32, #tpu.memory_space<vmem>>, vector<32x32xf32>
    %cst = arith.constant dense<0.000000e+00> : vector<16x32xf32>
    %5 = tpu.matmul %3, %4, %cst {dimension_numbers = #tpu.dot_dimension_numbers<[1], [0], [0], [1], [0, 0, 1, 1], [], []>} : vector<16x32xf32>, vector<32x32xf32>, vector<16x32xf32> -> vector<16x32xf32>
    %c0_8 = arith.constant 0 : index
    %c0_9 = arith.constant 0 : index
    %6 = vector.load %arg6[%c0_8, %c0_9] : memref<1x32xf32, #tpu.memory_space<vmem>>, vector<1x32xf32>
    %7 = vector.broadcast %6 : vector<1x32xf32> to vector<16x32xf32>
    %8 = arith.addf %5, %7 : vector<16x32xf32>
    %9 = vector.shape_cast %8 : vector<16x32xf32> to vector<2x8x32xf32>
    %c0_10 = arith.constant 0 : index
    %c0_11 = arith.constant 0 : index
    %10 = vector.load %arg7[%c0_10, %c0_11] : memref<32x64xf32, #tpu.memory_space<vmem>>, vector<32x64xf32>
    %cst_12 = arith.constant dense<0.000000e+00> : vector<2x64xf32>
    %11 = tpu.matmul %1, %10, %cst_12 {dimension_numbers = #tpu.dot_dimension_numbers<[1], [0], [0], [1], [0, 0, 1, 1], [], []>} : vector<2x32xf32>, vector<32x64xf32>, vector<2x64xf32> -> vector<2x64xf32>
    %c0_13 = arith.constant 0 : index
    %c0_14 = arith.constant 0 : index
    %12 = vector.load %arg8[%c0_13, %c0_14] : memref<1x64xf32, #tpu.memory_space<vmem>>, vector<1x64xf32>
    %13 = vector.broadcast %12 : vector<1x64xf32> to vector<2x64xf32>
    %14 = arith.addf %11, %13 : vector<2x64xf32>
    %c0_15 = arith.constant 0 : index
    %c0_16 = arith.constant 0 : index
    %15 = vector.load %arg9[%c0_15, %c0_16] : memref<32x64xf32, #tpu.memory_space<vmem>>, vector<32x64xf32>
    %cst_17 = arith.constant dense<0.000000e+00> : vector<2x64xf32>
    %16 = tpu.matmul %2, %15, %cst_17 {dimension_numbers = #tpu.dot_dimension_numbers<[1], [0], [0], [1], [0, 0, 1, 1], [], []>} : vector<2x32xf32>, vector<32x64xf32>, vector<2x64xf32> -> vector<2x64xf32>
    %c0_18 = arith.constant 0 : index
    %c0_19 = arith.constant 0 : index
    %17 = vector.load %arg10[%c0_18, %c0_19] : memref<1x64xf32, #tpu.memory_space<vmem>>, vector<1x64xf32>
    %18 = vector.broadcast %17 : vector<1x64xf32> to vector<2x64xf32>
    %19 = arith.addf %16, %18 : vector<2x64xf32>
    %20 = vector.extract_strided_slice %14 {offsets = [0, 0], sizes = [2, 32], strides = [1, 1]} : vector<2x64xf32> to vector<2x32xf32>
    %21 = vector.extract_strided_slice %14 {offsets = [0, 32], sizes = [2, 32], strides = [1, 1]} : vector<2x64xf32> to vector<2x32xf32>
    %22 = vector.extract_strided_slice %19 {offsets = [0, 0], sizes = [2, 32], strides = [1, 1]} : vector<2x64xf32> to vector<2x32xf32>
    %23 = vector.extract_strided_slice %19 {offsets = [0, 32], sizes = [2, 32], strides = [1, 1]} : vector<2x64xf32> to vector<2x32xf32>
    %24 = vector.shape_cast %20 : vector<2x32xf32> to vector<2x1x32xf32>
    %25 = vector.broadcast %24 : vector<2x1x32xf32> to vector<2x8x32xf32>
    %26 = arith.addf %9, %25 : vector<2x8x32xf32>
    %27 = vector.shape_cast %22 : vector<2x32xf32> to vector<2x1x32xf32>
    %28 = vector.broadcast %27 : vector<2x1x32xf32> to vector<2x8x32xf32>
    %29 = arith.addf %26, %28 : vector<2x8x32xf32>
    %30 = arith.negf %29 : vector<2x8x32xf32>
    %31 = math.exp %30 : vector<2x8x32xf32>
    %cst_20 = arith.constant 1.000000e+00 : f32
    %32 = vector.broadcast %cst_20 : f32 to vector<2x8x32xf32>
    %33 = arith.addf %32, %31 : vector<2x8x32xf32>
    %34 = arith.divf %32, %33 : vector<2x8x32xf32>
    %c0_21 = arith.constant 0 : index
    %c0_22 = arith.constant 0 : index
    %c0_23 = arith.constant 0 : index
    %35 = vector.load %arg11[%c0_21, %c0_22, %c0_23] : memref<1x1x32xf32, #tpu.memory_space<vmem>>, vector<1x1x32xf32>
    %36 = vector.shape_cast %35 : vector<1x1x32xf32> to vector<1x1x32xf32>
    %37 = vector.broadcast %36 : vector<1x1x32xf32> to vector<2x1x32xf32>
    "tpu.trace_start"() <{level = 10 : i32, message = "bqd,bld->bql"}> : () -> ()
    %cst_24 = arith.constant dense<0.000000e+00> : vector<2x1x8xf32>
    %38 = tpu.matmul %37, %34, %cst_24 {dimension_numbers = #tpu.dot_dimension_numbers<[2], [2], [1], [1], [0, 0, 0, 1, 1, 1], [0], [0]>} : vector<2x1x32xf32>, vector<2x8x32xf32>, vector<2x1x8xf32> -> vector<2x1x8xf32>
    "tpu.trace_stop"() : () -> ()
    %c0_25 = arith.constant 0 : index
    %c0_26 = arith.constant 0 : index
    %39 = vector.load %arg1[%c0_25, %c0_26] : memref<2x8xf32, #tpu.memory_space<vmem>>, vector<2x8xf32>
    %40 = vector.shape_cast %39 : vector<2x8xf32> to vector<2x1x8xf32>
    %41 = arith.mulf %38, %40 : vector<2x1x8xf32>
    "tpu.trace_start"() <{level = 10 : i32, message = "bql,bld->bqd"}> : () -> ()
    %cst_27 = arith.constant dense<0.000000e+00> : vector<2x1x32xf32>
    %42 = tpu.matmul %41, %0, %cst_27 {dimension_numbers = #tpu.dot_dimension_numbers<[2], [1], [1], [2], [0, 0, 0, 1, 1, 2], [0], [0]>} : vector<2x1x8xf32>, vector<2x8x32xf32>, vector<2x1x32xf32> -> vector<2x1x32xf32>
    "tpu.trace_stop"() : () -> ()
    %43 = vector.shape_cast %42 : vector<2x1x32xf32> to vector<2x32xf32>
    %c0_28 = arith.constant 0 : index
    %c0_29 = arith.constant 0 : index
    %44 = vector.load %arg12[%c0_28, %c0_29] : memref<32x32xf32, #tpu.memory_space<vmem>>, vector<32x32xf32>
    %cst_30 = arith.constant dense<0.000000e+00> : vector<2x32xf32>
    %45 = tpu.matmul %43, %44, %cst_30 {dimension_numbers = #tpu.dot_dimension_numbers<[1], [0], [0], [1], [0, 0, 1, 1], [], []>} : vector<2x32xf32>, vector<32x32xf32>, vector<2x32xf32> -> vector<2x32xf32>
    %c0_31 = arith.constant 0 : index
    %c0_32 = arith.constant 0 : index
    %46 = vector.load %arg13[%c0_31, %c0_32] : memref<1x32xf32, #tpu.memory_space<vmem>>, vector<1x32xf32>
    %47 = vector.broadcast %46 : vector<1x32xf32> to vector<2x32xf32>
    %48 = arith.addf %45, %47 : vector<2x32xf32>
    %49 = arith.maximumf %48, %21 : vector<2x32xf32>
    %50 = arith.maximumf %49, %23 : vector<2x32xf32>
    %51 = arith.subf %48, %50 : vector<2x32xf32>
    %52 = math.exp %51 : vector<2x32xf32>
    %53 = arith.subf %21, %50 : vector<2x32xf32>
    %54 = math.exp %53 : vector<2x32xf32>
    %55 = arith.subf %23, %50 : vector<2x32xf32>
    %56 = math.exp %55 : vector<2x32xf32>
    %57 = arith.addf %52, %54 : vector<2x32xf32>
    %58 = arith.addf %57, %56 : vector<2x32xf32>
    %59 = tpu.reciprocal %58 {approx = true} : vector<2x32xf32> -> vector<2x32xf32>
    %60 = arith.mulf %52, %48 : vector<2x32xf32>
    %61 = arith.mulf %54, %21 : vector<2x32xf32>
    %62 = arith.addf %60, %61 : vector<2x32xf32>
    %63 = arith.mulf %56, %23 : vector<2x32xf32>
    %64 = arith.addf %62, %63 : vector<2x32xf32>
    %65 = arith.mulf %64, %59 : vector<2x32xf32>
    %c0_33 = arith.constant 0 : index
    %c0_34 = arith.constant 0 : index
    %66 = vector.load %arg14[%c0_33, %c0_34] : memref<32x32xf32, #tpu.memory_space<vmem>>, vector<32x32xf32>
    %cst_35 = arith.constant dense<0.000000e+00> : vector<2x32xf32>
    %67 = tpu.matmul %65, %66, %cst_35 {dimension_numbers = #tpu.dot_dimension_numbers<[1], [0], [0], [1], [0, 0, 1, 1], [], []>} : vector<2x32xf32>, vector<32x32xf32>, vector<2x32xf32> -> vector<2x32xf32>
    %c0_36 = arith.constant 0 : index
    %c0_37 = arith.constant 0 : index
    %68 = vector.load %arg15[%c0_36, %c0_37] : memref<1x32xf32, #tpu.memory_space<vmem>>, vector<1x32xf32>
    %69 = vector.broadcast %68 : vector<1x32xf32> to vector<2x32xf32>
    %70 = arith.addf %67, %69 : vector<2x32xf32>
    %c0_38 = arith.constant 0 : index
    %c0_39 = arith.constant 0 : index
    %71 = vector.load %arg16[%c0_38, %c0_39] : memref<2x32xf32, #tpu.memory_space<vmem>>, vector<2x32xf32>
    tpu.vector_store %arg16[%c0_38, %c0_39], %70 {strides = array<i32>} : memref<2x32xf32, #tpu.memory_space<vmem>>, vector<2x32xf32>,
    return
  }
  func.func @transform_0(%arg0: i32) -> (i32, i32) {
    %c0_i32 = arith.constant 0 : i32
    %c0_i32_0 = arith.constant 0 : i32
    return %arg0, %c0_i32 : i32, i32
  }
  func.func @transform_1(%arg0: i32) -> (i32, i32) {
    %c0_i32 = arith.constant 0 : i32
    %c0_i32_0 = arith.constant 0 : i32
    return %arg0, %c0_i32 : i32, i32
  }
  func.func @transform_2(%arg0: i32) -> (i32, i32, i32) {
    %c0_i32 = arith.constant 0 : i32
    %c0_i32_0 = arith.constant 0 : i32
    %c0_i32_1 = arith.constant 0 : i32
    return %arg0, %c0_i32, %c0_i32_0 : i32, i32, i32
  }
  func.func @transform_3(%arg0: i32) -> (i32, i32) {
    %c0_i32 = arith.constant 0 : i32
    %c0_i32_0 = arith.constant 0 : i32
    return %arg0, %c0_i32 : i32, i32
  }
  func.func @transform_4(%arg0: i32) -> (i32, i32) {
    %c0_i32 = arith.constant 0 : i32
    %c0_i32_0 = arith.constant 0 : i32
    %c0_i32_1 = arith.constant 0 : i32
    return %c0_i32, %c0_i32_0 : i32, i32
  }
  func.func @transform_5(%arg0: i32) -> (i32, i32) {
    %c0_i32 = arith.constant 0 : i32
    %c0_i32_0 = arith.constant 0 : i32
    %c0_i32_1 = arith.constant 0 : i32
    return %c0_i32, %c0_i32_0 : i32, i32
  }
  func.func @transform_6(%arg0: i32) -> (i32, i32) {
    %c0_i32 = arith.constant 0 : i32
    %c0_i32_0 = arith.constant 0 : i32
    %c0_i32_1 = arith.constant 0 : i32
    return %c0_i32, %c0_i32_0 : i32, i32
  }
  func.func @transform_7(%arg0: i32) -> (i32, i32) {
    %c0_i32 = arith.constant 0 : i32
    %c0_i32_0 = arith.constant 0 : i32
    %c0_i32_1 = arith.constant 0 : i32
    return %c0_i32, %c0_i32_0 : i32, i32
  }
  func.func @transform_8(%arg0: i32) -> (i32, i32) {
    %c0_i32 = arith.constant 0 : i32
    %c0_i32_0 = arith.constant 0 : i32
    %c0_i32_1 = arith.constant 0 : i32
    return %c0_i32, %c0_i32_0 : i32, i32
  }
  func.func @transform_9(%arg0: i32) -> (i32, i32) {
    %c0_i32 = arith.constant 0 : i32
    %c0_i32_0 = arith.constant 0 : i32
    %c0_i32_1 = arith.constant 0 : i32
    return %c0_i32, %c0_i32_0 : i32, i32
  }
  func.func @transform_10(%arg0: i32) -> (i32, i32, i32) {
    %c0_i32 = arith.constant 0 : i32
    %c0_i32_0 = arith.constant 0 : i32
    %c0_i32_1 = arith.constant 0 : i32
    %c0_i32_2 = arith.constant 0 : i32
    return %c0_i32, %c0_i32_0, %c0_i32_1 : i32, i32, i32
  }
  func.func @transform_11(%arg0: i32) -> (i32, i32) {
    %c0_i32 = arith.constant 0 : i32
    %c0_i32_0 = arith.constant 0 : i32
    %c0_i32_1 = arith.constant 0 : i32
    return %c0_i32, %c0_i32_0 : i32, i32
  }
  func.func @transform_12(%arg0: i32) -> (i32, i32) {
    %c0_i32 = arith.constant 0 : i32
    %c0_i32_0 = arith.constant 0 : i32
    %c0_i32_1 = arith.constant 0 : i32
    return %c0_i32, %c0_i32_0 : i32, i32
  }
  func.func @transform_13(%arg0: i32) -> (i32, i32) {
    %c0_i32 = arith.constant 0 : i32
    %c0_i32_0 = arith.constant 0 : i32
    %c0_i32_1 = arith.constant 0 : i32
    return %c0_i32, %c0_i32_0 : i32, i32
  }
  func.func @transform_14(%arg0: i32) -> (i32, i32) {
    %c0_i32 = arith.constant 0 : i32
    %c0_i32_0 = arith.constant 0 : i32
    %c0_i32_1 = arith.constant 0 : i32
    return %c0_i32, %c0_i32_0 : i32, i32
  }
  func.func @transform_15(%arg0: i32) -> (i32, i32) {
    %c0_i32 = arith.constant 0 : i32
    %c0_i32_0 = arith.constant 0 : i32
    return %arg0, %c0_i32 : i32, i32
  }
}

</mosaic_0001>

<llo_original>
// kernel: tpu_custom_call.1
$region0: #{tpu_custom_call.1}
  #allocation0 [shape = 'u32[]', space=smem, size = 0x4, offset = 0x4, fixed_abs, tag = 'smem constant byte address 0x4 - core index']
  #allocation1 [shape = 'u32[144,128]{1,0:T(1,128)}', space=vmem, size = 0x12000, scoped, tag = 'internal scratch']
  %s0 = inlined_call_operand.hbm [shape: f32[2,8], index: 0, kind: input, shape index: {}]
  %s1 = inlined_call_operand.hbm [shape: f32[2,32], index: 1, kind: input, shape index: {}]
  %s2 = inlined_call_operand.hbm [shape: f32[2,8,32], index: 2, kind: input, shape index: {}]
  %s3 = inlined_call_operand.hbm [shape: f32[2,32], index: 3, kind: input, shape index: {}]
  %s4 = inlined_call_operand.hbm [shape: f32[32,32], index: 4, kind: input, shape index: {}]
  %s5 = inlined_call_operand.hbm [shape: f32[1,32], index: 5, kind: input, shape index: {}]
  %s6 = inlined_call_operand.hbm [shape: f32[32,64], index: 6, kind: input, shape index: {}]
  %s7 = inlined_call_operand.hbm [shape: f32[1,64], index: 7, kind: input, shape index: {}]
  %s8 = inlined_call_operand.hbm [shape: f32[32,64], index: 8, kind: input, shape index: {}]
  %s9 = inlined_call_operand.hbm [shape: f32[1,64], index: 9, kind: input, shape index: {}]
  %s10 = inlined_call_operand.hbm [shape: f32[1,1,32], index: 10, kind: input, shape index: {}]
  %s11 = inlined_call_operand.hbm [shape: f32[32,32], index: 11, kind: input, shape index: {}]
  %s12 = inlined_call_operand.hbm [shape: f32[1,32], index: 12, kind: input, shape index: {}]
  %s13 = inlined_call_operand.hbm [shape: f32[32,32], index: 13, kind: input, shape index: {}]
  %s14 = inlined_call_operand.hbm [shape: f32[1,32], index: 14, kind: input, shape index: {}]
  %s15 = inlined_call_operand.hbm [shape: f32[2,32], index: 15, kind: output, shape index: {}]
  %s16 = sld [smem:[#allocation0]]
  $region130: #{tpu_custom_call.1} parent=0
    _
  %s18 = ssub.s32 1, %s16
  %s19 = scalar_select 0, %s18, %s16
  $region1: #{tpu_custom_call.1} parent=0
    #allocation2 [shape = 'u8[1024]{0}', space=vmem, size = 0x400, scoped, tag = 'input window, operand 0, single buffered']
    #allocation3 [shape = 's32[1]{0}', space=sflag, size = 0x4, scoped, tag = 'scoped memory for tpu_custom_call.1']
    #allocation4 [shape = 's32[1]{0}', space=sflag, size = 0x4, scoped, tag = 'scoped memory for tpu_custom_call.1']
    #allocation5 [shape = 'u8[1024]{0}', space=vmem, size = 0x400, scoped, tag = 'input window, operand 1, single buffered']
    #allocation6 [shape = 's32[1]{0}', space=sflag, size = 0x4, scoped, tag = 'scoped memory for tpu_custom_call.1']
    #allocation7 [shape = 'u8[8192]{0}', space=vmem, size = 0x2000, scoped, tag = 'input window, operand 2, single buffered']
    #allocation8 [shape = 'u8[1024]{0}', space=vmem, size = 0x400, scoped, tag = 'input window, operand 3, single buffered']
    #allocation9 [shape = 's32[1]{0}', space=sflag, size = 0x4, scoped, tag = 'scoped memory for tpu_custom_call.1']
    #allocation10 [shape = 'u8[16384]{0}', space=vmem, size = 0x4000, scoped, tag = 'input window, operand 4, single buffered']
    #allocation11 [shape = 'u8[512]{0}', space=vmem, size = 0x400, scoped, tag = 'input window, operand 5, single buffered']
    #allocation12 [shape = 's32[1]{0}', space=sflag, size = 0x4, scoped, tag = 'scoped memory for tpu_custom_call.1']
    #allocation13 [shape = 'u8[16384]{0}', space=vmem, size = 0x4000, scoped, tag = 'input window, operand 6, single buffered']
    #allocation14 [shape = 'u8[512]{0}', space=vmem, size = 0x400, scoped, tag = 'input window, operand 7, single buffered']
    #allocation15 [shape = 's32[1]{0}', space=sflag, size = 0x4, scoped, tag = 'scoped memory for tpu_custom_call.1']
    #allocation16 [shape = 'u8[16384]{0}', space=vmem, size = 0x4000, scoped, tag = 'input window, operand 8, single buffered']
    #allocation17 [shape = 'u8[512]{0}', space=vmem, size = 0x400, scoped, tag = 'input window, operand 9, single buffered']
    #allocation18 [shape = 's32[1]{0}', space=sflag, size = 0x4, scoped, tag = 'scoped memory for tpu_custom_call.1']
    #allocation19 [shape = 'u8[512]{0}', space=vmem, size = 0x400, scoped, tag = 'input window, operand 10, single buffered']
    #allocation20 [shape = 'u8[16384]{0}', space=vmem, size = 0x4000, scoped, tag = 'input window, operand 11, single buffered']
    #allocation21 [shape = 's32[1]{0}', space=sflag, size = 0x4, scoped, tag = 'scoped memory for tpu_custom_call.1']
    #allocation22 [shape = 'u8[512]{0}', space=vmem, size = 0x400, scoped, tag = 'input window, operand 12, single buffered']
    #allocation23 [shape = 'u8[16384]{0}', space=vmem, size = 0x4000, scoped, tag = 'input window, operand 13, single buffered']
    #allocation24 [shape = 's32[1]{0}', space=sflag, size = 0x4, scoped, tag = 'scoped memory for tpu_custom_call.1']
    #allocation25 [shape = 'u8[512]{0}', space=vmem, size = 0x400, scoped, tag = 'input window, operand 14, single buffered']
    #allocation26 [shape = 'u8[1024]{0}', space=vmem, size = 0x400, scoped, tag = 'output window, operand 0, single buffered']
    %20 = vsyncpa [#allocation3], 0
    %21 = vsyncpa [#allocation6], 0
    %22 = vsyncpa [#allocation9], 0
    %23 = vsyncpa [#allocation12], 0
    %24 = vsyncpa [#allocation15], 0
    %25 = vsyncpa [#allocation18], 0
    %26 = vsyncpa [#allocation21], 0
    %27 = vsyncpa [#allocation24], 0
    %28 = vsyncpa [#allocation4], 0
    // Predicated region
    $region2: #{tpu_custom_call.1} parent=1 // pred_check
      _
    $region3: #{tpu_custom_call.1} parent=1 // pred_check_branch
      %30 = sbr.rel (0) target = $region5
    $region4: #{tpu_custom_call.1} parent=1 // pred_region
      %s32 = ssub.s32 32, 32
      %33 = vsyncadd [#allocation3], %s32
      %s35 = sshll.u32 [#allocation2], 4
      %s36 = int_to_ptr.vmem [resolvable:$true] %s35
      %38 = dma.hbm_to_vmem [thread:$0]  %s0, 32, %s36, [#allocation3]
    $region5: #{tpu_custom_call.1} parent=1 // pred_fallthru
      _
    // Predicated region
    $region6: #{tpu_custom_call.1} parent=1 // pred_check
      _
    $region7: #{tpu_custom_call.1} parent=1 // pred_check_branch
      %40 = sbr.rel (0) target = $region9
    $region8: #{tpu_custom_call.1} parent=1 // pred_region
      %s42 = ssub.s32 32, 32
      %43 = vsyncadd [#allocation6], %s42
      %s45 = sshll.u32 [#allocation5], 4
      %s46 = int_to_ptr.vmem [resolvable:$true] %s45
      %48 = dma.hbm_to_vmem [thread:$0]  %s1, 32, %s46, [#allocation6]
    $region9: #{tpu_custom_call.1} parent=1 // pred_fallthru
      _
    // Predicated region
    $region10: #{tpu_custom_call.1} parent=1 // pred_check
      _
    $region11: #{tpu_custom_call.1} parent=1 // pred_check_branch
      %50 = sbr.rel (0) target = $region13
    $region12: #{tpu_custom_call.1} parent=1 // pred_region
      %s52 = ssub.s32 256, 256
      %53 = vsyncadd [#allocation6], %s52
      %s54 = sshll.u32 [#allocation7], 4
      %s55 = int_to_ptr.vmem [resolvable:$true] %s54
      %60 = dma.hbm_to_vmem [thread:$0]  %s2, 256, %s55, [#allocation6], 128, 128, 8
    $region13: #{tpu_custom_call.1} parent=1 // pred_fallthru
      _
    // Predicated region
    $region14: #{tpu_custom_call.1} parent=1 // pred_check
      _
    $region15: #{tpu_custom_call.1} parent=1 // pred_check_branch
      %62 = sbr.rel (0) target = $region17
    $region16: #{tpu_custom_call.1} parent=1 // pred_region
      %s64 = ssub.s32 32, 32
      %65 = vsyncadd [#allocation9], %s64
      %s67 = sshll.u32 [#allocation8], 4
      %s68 = int_to_ptr.vmem [resolvable:$true] %s67
      %70 = dma.hbm_to_vmem [thread:$0]  %s3, 32, %s68, [#allocation9]
    $region17: #{tpu_custom_call.1} parent=1 // pred_fallthru
      _
    // Predicated region
    $region18: #{tpu_custom_call.1} parent=1 // pred_check
      _
    $region19: #{tpu_custom_call.1} parent=1 // pred_check_branch
      %72 = sbr.rel (0) target = $region21
    $region20: #{tpu_custom_call.1} parent=1 // pred_region
      %s74 = ssub.s32 512, 512
      %75 = vsyncadd [#allocation9], %s74
      %s76 = sshll.u32 [#allocation10], 4
      %s77 = int_to_ptr.vmem [resolvable:$true] %s76
      %82 = dma.hbm_to_vmem [thread:$0]  %s4, 512, %s77, [#allocation9], 128, 128, 8
    $region21: #{tpu_custom_call.1} parent=1 // pred_fallthru
      _
    // Predicated region
    $region22: #{tpu_custom_call.1} parent=1 // pred_check
      _
    $region23: #{tpu_custom_call.1} parent=1 // pred_check_branch
      %84 = sbr.rel (0) target = $region25
    $region24: #{tpu_custom_call.1} parent=1 // pred_region
      %s86 = ssub.s32 16, 16
      %87 = vsyncadd [#allocation12], %s86
      %s89 = sshll.u32 [#allocation11], 4
      %s90 = int_to_ptr.vmem [resolvable:$true] %s89
      %92 = dma.hbm_to_vmem [thread:$0]  %s5, 16, %s90, [#allocation12]
    $region25: #{tpu_custom_call.1} parent=1 // pred_fallthru
      _
    // Predicated region
    $region26: #{tpu_custom_call.1} parent=1 // pred_check
      _
    $region27: #{tpu_custom_call.1} parent=1 // pred_check_branch
      %94 = sbr.rel (0) target = $region29
    $region28: #{tpu_custom_call.1} parent=1 // pred_region
      %s96 = ssub.s32 512, 512
      %97 = vsyncadd [#allocation12], %s96
      %s98 = sshll.u32 [#allocation13], 4
      %s99 = int_to_ptr.vmem [resolvable:$true] %s98
      %104 = dma.hbm_to_vmem [thread:$0]  %s6, 512, %s99, [#allocation12], 128, 128, 8
    $region29: #{tpu_custom_call.1} parent=1 // pred_fallthru
      _
    // Predicated region
    $region30: #{tpu_custom_call.1} parent=1 // pred_check
      _
    $region31: #{tpu_custom_call.1} parent=1 // pred_check_branch
      %106 = sbr.rel (0) target = $region33
    $region32: #{tpu_custom_call.1} parent=1 // pred_region
      %s108 = ssub.s32 16, 16
      %109 = vsyncadd [#allocation15], %s108
      %s111 = sshll.u32 [#allocation14], 4
      %s112 = int_to_ptr.vmem [resolvable:$true] %s111
      %114 = dma.hbm_to_vmem [thread:$0]  %s7, 16, %s112, [#allocation15]
    $region33: #{tpu_custom_call.1} parent=1 // pred_fallthru
      _
    // Predicated region
    $region34: #{tpu_custom_call.1} parent=1 // pred_check
      _
    $region35: #{tpu_custom_call.1} parent=1 // pred_check_branch
      %116 = sbr.rel (0) target = $region37
    $region36: #{tpu_custom_call.1} parent=1 // pred_region
      %s118 = ssub.s32 512, 512
      %119 = vsyncadd [#allocation15], %s118
      %s120 = sshll.u32 [#allocation16], 4
      %s121 = int_to_ptr.vmem [resolvable:$true] %s120
      %126 = dma.hbm_to_vmem [thread:$0]  %s8, 512, %s121, [#allocation15], 128, 128, 8
    $region37: #{tpu_custom_call.1} parent=1 // pred_fallthru
      _
    // Predicated region
    $region38: #{tpu_custom_call.1} parent=1 // pred_check
      _
    $region39: #{tpu_custom_call.1} parent=1 // pred_check_branch
      %128 = sbr.rel (0) target = $region41
    $region40: #{tpu_custom_call.1} parent=1 // pred_region
      %s130 = ssub.s32 16, 16
      %131 = vsyncadd [#allocation18], %s130
      %s133 = sshll.u32 [#allocation17], 4
      %s134 = int_to_ptr.vmem [resolvable:$true] %s133
      %136 = dma.hbm_to_vmem [thread:$0]  %s9, 16, %s134, [#allocation18]
    $region41: #{tpu_custom_call.1} parent=1 // pred_fallthru
      _
    // Predicated region
    $region42: #{tpu_custom_call.1} parent=1 // pred_check
      _
    $region43: #{tpu_custom_call.1} parent=1 // pred_check_branch
      %138 = sbr.rel (0) target = $region45
    $region44: #{tpu_custom_call.1} parent=1 // pred_region
      %s140 = ssub.s32 16, 16
      %141 = vsyncadd [#allocation18], %s140
      %s143 = sshll.u32 [#allocation19], 4
      %s144 = int_to_ptr.vmem [resolvable:$true] %s143
      %146 = dma.hbm_to_vmem [thread:$0]  %s10, 16, %s144, [#allocation18]
    $region45: #{tpu_custom_call.1} parent=1 // pred_fallthru
      _
    // Predicated region
    $region46: #{tpu_custom_call.1} parent=1 // pred_check
      _
    $region47: #{tpu_custom_call.1} parent=1 // pred_check_branch
      %148 = sbr.rel (0) target = $region49
    $region48: #{tpu_custom_call.1} parent=1 // pred_region
      %s150 = ssub.s32 512, 512
      %151 = vsyncadd [#allocation21], %s150
      %s152 = sshll.u32 [#allocation20], 4
      %s153 = int_to_ptr.vmem [resolvable:$true] %s152
      %158 = dma.hbm_to_vmem [thread:$0]  %s11, 512, %s153, [#allocation21], 128, 128, 8
    $region49: #{tpu_custom_call.1} parent=1 // pred_fallthru
      _
    // Predicated region
    $region50: #{tpu_custom_call.1} parent=1 // pred_check
      _
    $region51: #{tpu_custom_call.1} parent=1 // pred_check_branch
      %160 = sbr.rel (0) target = $region53
    $region52: #{tpu_custom_call.1} parent=1 // pred_region
      %s162 = ssub.s32 16, 16
      %163 = vsyncadd [#allocation21], %s162
      %s165 = sshll.u32 [#allocation22], 4
      %s166 = int_to_ptr.vmem [resolvable:$true] %s165
      %168 = dma.hbm_to_vmem [thread:$0]  %s12, 16, %s166, [#allocation21]
    $region53: #{tpu_custom_call.1} parent=1 // pred_fallthru
      _
    // Predicated region
    $region54: #{tpu_custom_call.1} parent=1 // pred_check
      _
    $region55: #{tpu_custom_call.1} parent=1 // pred_check_branch
      %170 = sbr.rel (0) target = $region57
    $region56: #{tpu_custom_call.1} parent=1 // pred_region
      %s172 = ssub.s32 512, 512
      %173 = vsyncadd [#allocation24], %s172
      %s174 = sshll.u32 [#allocation23], 4
      %s175 = int_to_ptr.vmem [resolvable:$true] %s174
      %180 = dma.hbm_to_vmem [thread:$0]  %s13, 512, %s175, [#allocation24], 128, 128, 8
    $region57: #{tpu_custom_call.1} parent=1 // pred_fallthru
      _
    // Predicated region
    $region58: #{tpu_custom_call.1} parent=1 // pred_check
      _
    $region59: #{tpu_custom_call.1} parent=1 // pred_check_branch
      %182 = sbr.rel (0) target = $region61
    $region60: #{tpu_custom_call.1} parent=1 // pred_region
      %s184 = ssub.s32 16, 16
      %185 = vsyncadd [#allocation24], %s184
      %s187 = sshll.u32 [#allocation25], 4
      %s188 = int_to_ptr.vmem [resolvable:$true] %s187
      %190 = dma.hbm_to_vmem [thread:$0]  %s14, 16, %s188, [#allocation24]
    $region61: #{tpu_custom_call.1} parent=1 // pred_fallthru
      _
    // Predicated region
    $region62: #{tpu_custom_call.1} parent=1 // pred_check
      _
    $region63: #{tpu_custom_call.1} parent=1 // pred_check_branch
      %192 = sbr.rel (0) target = $region65
    $region64: #{tpu_custom_call.1} parent=1 // pred_region
      %193 = dma.done [#allocation3], 32
    $region65: #{tpu_custom_call.1} parent=1 // pred_fallthru
      _
    // Predicated region
    $region66: #{tpu_custom_call.1} parent=1 // pred_check
      _
    $region67: #{tpu_custom_call.1} parent=1 // pred_check_branch
      %195 = sbr.rel (0) target = $region69
    $region68: #{tpu_custom_call.1} parent=1 // pred_region
      %196 = dma.done [#allocation6], 32
    $region69: #{tpu_custom_call.1} parent=1 // pred_fallthru
      _
    // Predicated region
    $region70: #{tpu_custom_call.1} parent=1 // pred_check
      _
    $region71: #{tpu_custom_call.1} parent=1 // pred_check_branch
      %198 = sbr.rel (0) target = $region73
    $region72: #{tpu_custom_call.1} parent=1 // pred_region
      %199 = dma.done [#allocation6], 256
    $region73: #{tpu_custom_call.1} parent=1 // pred_fallthru
      _
    // Predicated region
    $region74: #{tpu_custom_call.1} parent=1 // pred_check
      _
    $region75: #{tpu_custom_call.1} parent=1 // pred_check_branch
      %201 = sbr.rel (0) target = $region77
    $region76: #{tpu_custom_call.1} parent=1 // pred_region
      %202 = dma.done [#allocation9], 32
    $region77: #{tpu_custom_call.1} parent=1 // pred_fallthru
      _
    // Predicated region
    $region78: #{tpu_custom_call.1} parent=1 // pred_check
      _
    $region79: #{tpu_custom_call.1} parent=1 // pred_check_branch
      %204 = sbr.rel (0) target = $region81
    $region80: #{tpu_custom_call.1} parent=1 // pred_region
      %205 = dma.done [#allocation9], 512
    $region81: #{tpu_custom_call.1} parent=1 // pred_fallthru
      _
    // Predicated region
    $region82: #{tpu_custom_call.1} parent=1 // pred_check
      _
    $region83: #{tpu_custom_call.1} parent=1 // pred_check_branch
      %207 = sbr.rel (0) target = $region85
    $region84: #{tpu_custom_call.1} parent=1 // pred_region
      %208 = dma.done [#allocation12], 16
    $region85: #{tpu_custom_call.1} parent=1 // pred_fallthru
      _
    // Predicated region
    $region86: #{tpu_custom_call.1} parent=1 // pred_check
      _
    $region87: #{tpu_custom_call.1} parent=1 // pred_check_branch
      %210 = sbr.rel (0) target = $region89
    $region88: #{tpu_custom_call.1} parent=1 // pred_region
      %211 = dma.done [#allocation12], 512
    $region89: #{tpu_custom_call.1} parent=1 // pred_fallthru
      _
    // Predicated region
    $region90: #{tpu_custom_call.1} parent=1 // pred_check
      _
    $region91: #{tpu_custom_call.1} parent=1 // pred_check_branch
      %213 = sbr.rel (0) target = $region93
    $region92: #{tpu_custom_call.1} parent=1 // pred_region
      %214 = dma.done [#allocation15], 16
    $region93: #{tpu_custom_call.1} parent=1 // pred_fallthru
      _
    // Predicated region
    $region94: #{tpu_custom_call.1} parent=1 // pred_check
      _
    $region95: #{tpu_custom_call.1} parent=1 // pred_check_branch
      %216 = sbr.rel (0) target = $region97
    $region96: #{tpu_custom_call.1} parent=1 // pred_region
      %217 = dma.done [#allocation15], 512
    $region97: #{tpu_custom_call.1} parent=1 // pred_fallthru
      _
    // Predicated region
    $region98: #{tpu_custom_call.1} parent=1 // pred_check
      _
    $region99: #{tpu_custom_call.1} parent=1 // pred_check_branch
      %219 = sbr.rel (0) target = $region101
    $region100: #{tpu_custom_call.1} parent=1 // pred_region
      %220 = dma.done [#allocation18], 16
    $region101: #{tpu_custom_call.1} parent=1 // pred_fallthru
      _
    // Predicated region
    $region102: #{tpu_custom_call.1} parent=1 // pred_check
      _
    $region103: #{tpu_custom_call.1} parent=1 // pred_check_branch
      %222 = sbr.rel (0) target = $region105
    $region104: #{tpu_custom_call.1} parent=1 // pred_region
      %223 = dma.done [#allocation18], 16
    $region105: #{tpu_custom_call.1} parent=1 // pred_fallthru
      _
    // Predicated region
    $region106: #{tpu_custom_call.1} parent=1 // pred_check
      _
    $region107: #{tpu_custom_call.1} parent=1 // pred_check_branch
      %225 = sbr.rel (0) target = $region109
    $region108: #{tpu_custom_call.1} parent=1 // pred_region
      %226 = dma.done [#allocation21], 512
    $region109: #{tpu_custom_call.1} parent=1 // pred_fallthru
      _
    // Predicated region
    $region110: #{tpu_custom_call.1} parent=1 // pred_check
      _
    $region111: #{tpu_custom_call.1} parent=1 // pred_check_branch
      %228 = sbr.rel (0) target = $region113
    $region112: #{tpu_custom_call.1} parent=1 // pred_region
      %229 = dma.done [#allocation21], 16
    $region113: #{tpu_custom_call.1} parent=1 // pred_fallthru
      _
    // Predicated region
    $region114: #{tpu_custom_call.1} parent=1 // pred_check
      _
    $region115: #{tpu_custom_call.1} parent=1 // pred_check_branch
      %231 = sbr.rel (0) target = $region117
    $region116: #{tpu_custom_call.1} parent=1 // pred_region
      %232 = dma.done [#allocation24], 512
    $region117: #{tpu_custom_call.1} parent=1 // pred_fallthru
      _
    // Predicated region
    $region118: #{tpu_custom_call.1} parent=1 // pred_check
      _
    $region119: #{tpu_custom_call.1} parent=1 // pred_check_branch
      %234 = sbr.rel (0) target = $region121
    $region120: #{tpu_custom_call.1} parent=1 // pred_region
      %235 = dma.done [#allocation24], 16
    $region121: #{tpu_custom_call.1} parent=1 // pred_fallthru
      _
    %v236 = vld [vmem:[#allocation7] sm:$0xff]
    %v237 = vld [vmem:[#allocation7 + $0x8] sm:$0xff]
    %v238 = vld [vmem:[#allocation5] sm:$0x3]
    %v239 = vld [vmem:[#allocation8] sm:$0x3]
    %v240 = vld [vmem:[#allocation10] sm:$0xff]
    %v241 = vld [vmem:[#allocation10 + $0x8] sm:$0xff]
    %v242 = vld [vmem:[#allocation10 + $0x10] sm:$0xff]
    %v243 = vld [vmem:[#allocation10 + $0x18] sm:$0xff]
    %v244 = vld [vmem:[#allocation11] sm:$0x1]
    %v246 = vlaneseq
    %v247 = vshrl.u32 %v246, 7
    %v248 = vsub.s32 0, %v247
    %v249 = vrot.slane %v244, %v248
    %vm251 = vcmask 261120
    %v253 = vsel %vm251, %v236, 0
    %v256 = vsel %vm251, %v237, 0
    %258 = vmatprep.subr.mxu0 0.0
    %259 = vmatpush1.msra.mxu0 %v240
    %260 = vmatprep.subr.mxu0 0.0
    %261 = vmatpush1.msra.mxu0 %v241
    %262 = vmatprep.subr.mxu0 0.0
    %263 = vmatpush1.msra.mxu0 %v242
    %264 = vmatprep.subr.mxu0 0.0
    %265 = vmatpush1.msra.mxu0 %v243
    %266 = vmatprep.subr.mxu0 0.0
    %267 = vmatpush1.msra.mxu0 0.0
    %268 = vmatprep.subr.mxu0 0.0
    %269 = vmatpush1.msra.mxu0 0.0
    %270 = vmatprep.subr.mxu0 0.0
    %271 = vmatpush1.msra.mxu0 0.0
    %272 = vmatprep.subr.mxu0 0.0
    %273 = vmatpush1.msra.mxu0 0.0
    %274 = vmatprep.subr.mxu0 0.0
    %275 = vmatpush1.msra.mxu0 0.0
    %276 = vmatprep.subr.mxu0 0.0
    %277 = vmatpush1.msra.mxu0 0.0
    %278 = vmatprep.subr.mxu0 0.0
    %279 = vmatpush1.msra.mxu0 0.0
    %280 = vmatprep.subr.mxu0 0.0
    %281 = vmatpush1.msra.mxu0 0.0
    %282 = vmatprep.subr.mxu0 0.0
    %283 = vmatpush1.msra.mxu0 0.0
    %284 = vmatprep.subr.mxu0 0.0
    %285 = vmatpush1.msra.mxu0 0.0
    %286 = vmatprep.subr.mxu0 0.0
    %287 = vmatpush1.msra.mxu0 0.0
    %288 = vmatprep.subr.mxu0 0.0
    %289 = vmatpush1.msra.mxu0 0.0
    %290 = vmatprep.subr.mxu0 0.0
    %291 = vmatpush1.msra.mxu0 0.0
    %292 = vmatprep.subr.mxu0 0.0
    %293 = vmatpush1.msra.mxu0 0.0
    %294 = vmatprep.subr.mxu0 0.0
    %295 = vmatpush1.msra.mxu0 0.0
    %296 = vmatprep.subr.mxu0 0.0
    %297 = vmatpush1.msra.mxu0 0.0
    %298 = vmatprep.subr.mxu0 0.0
    %299 = vmatpush1.msra.mxu0 0.0
    %300 = vmatprep.subr.mxu0 0.0
    %301 = vmatpush1.msra.mxu0 0.0
    %302 = vmatprep.subr.mxu0 0.0
    %303 = vmatpush1.msra.mxu0 0.0
    %304 = vmatprep.subr.mxu0 0.0
    %305 = vmatpush1.msra.mxu0 0.0
    %306 = vmatprep.subr.mxu0 0.0
    %307 = vmatpush1.msra.mxu0 0.0
    %308 = vmatprep.subr.mxu0 0.0
    %309 = vmatpush1.msra.mxu0 0.0
    %310 = vmatprep.subr.mxu0 0.0
    %311 = vmatpush1.msra.mxu0 0.0
    %312 = vmatprep.subr.mxu0 0.0
    %313 = vmatpush1.msra.mxu0 0.0
    %314 = vmatprep.subr.mxu0 0.0
    %315 = vmatpush1.msra.mxu0 0.0
    %316 = vmatprep.subr.mxu0 0.0
    %317 = vmatpush1.msra.mxu0 0.0
    %318 = vmatprep.subr.mxu0 0.0
    %319 = vmatpush1.msra.mxu0 0.0
    %320 = vmatprep.subr.mxu0 0.0
    %321 = vmatpush1.msra.mxu0 0.0
    %322 = vmatprep.mubr.f32.mxu0 0.0
    %323 = vmatmul.mubr.f32.gmra.mrb[0].mxu0 %v253
    %v324 = vpop.f32.mrb[0].mxu0
    %v325 = vadd.f32 %v249, %v324
    %v326 = vpop.f32.mrb[0].mxu0
    %327 = vmatprep.mubr.f32.mxu0 0.0
    %328 = vmatmul.mubr.f32.gmra.mrb[0].mxu0 %v256
    %v329 = vpop.f32.mrb[0].mxu0
    %v330 = vadd.f32 %v249, %v329
    %v331 = vpop.f32.mrb[0].mxu0
    %332 = vdwg.mxu0
    %v333 = vld [vmem:[#allocation13] sm:$0xff]
    %v334 = vld [vmem:[#allocation13 + $0x8] sm:$0xff]
    %v335 = vld [vmem:[#allocation13 + $0x10] sm:$0xff]
    %v336 = vld [vmem:[#allocation13 + $0x18] sm:$0xff]
    %v337 = vld [vmem:[#allocation14] sm:$0x1]
    %v339 = vlaneseq
    %v340 = vshrl.u32 %v339, 7
    %v341 = vsub.s32 0, %v340
    %v342 = vrot.slane %v337, %v341
    %v345 = vsel %vm251, %v238, 0
    %347 = vmatprep.subr.mxu0 0.0
    %348 = vmatpush1.msra.mxu0 %v333
    %349 = vmatprep.subr.mxu0 0.0
    %350 = vmatpush1.msra.mxu0 %v334
    %351 = vmatprep.subr.mxu0 0.0
    %352 = vmatpush1.msra.mxu0 %v335
    %353 = vmatprep.subr.mxu0 0.0
    %354 = vmatpush1.msra.mxu0 %v336
    %355 = vmatprep.subr.mxu0 0.0
    %356 = vmatpush1.msra.mxu0 0.0
    %357 = vmatprep.subr.mxu0 0.0
    %358 = vmatpush1.msra.mxu0 0.0
    %359 = vmatprep.subr.mxu0 0.0
    %360 = vmatpush1.msra.mxu0 0.0
    %361 = vmatprep.subr.mxu0 0.0
    %362 = vmatpush1.msra.mxu0 0.0
    %363 = vmatprep.subr.mxu0 0.0
    %364 = vmatpush1.msra.mxu0 0.0
    %365 = vmatprep.subr.mxu0 0.0
    %366 = vmatpush1.msra.mxu0 0.0
    %367 = vmatprep.subr.mxu0 0.0
    %368 = vmatpush1.msra.mxu0 0.0
    %369 = vmatprep.subr.mxu0 0.0
    %370 = vmatpush1.msra.mxu0 0.0
    %371 = vmatprep.subr.mxu0 0.0
    %372 = vmatpush1.msra.mxu0 0.0
    %373 = vmatprep.subr.mxu0 0.0
    %374 = vmatpush1.msra.mxu0 0.0
    %375 = vmatprep.subr.mxu0 0.0
    %376 = vmatpush1.msra.mxu0 0.0
    %377 = vmatprep.subr.mxu0 0.0
    %378 = vmatpush1.msra.mxu0 0.0
    %379 = vmatprep.subr.mxu0 0.0
    %380 = vmatpush1.msra.mxu0 0.0
    %381 = vmatprep.subr.mxu0 0.0
    %382 = vmatpush1.msra.mxu0 0.0
    %383 = vmatprep.subr.mxu0 0.0
    %384 = vmatpush1.msra.mxu0 0.0
    %385 = vmatprep.subr.mxu0 0.0
    %386 = vmatpush1.msra.mxu0 0.0
    %387 = vmatprep.subr.mxu0 0.0
    %388 = vmatpush1.msra.mxu0 0.0
    %389 = vmatprep.subr.mxu0 0.0
    %390 = vmatpush1.msra.mxu0 0.0
    %391 = vmatprep.subr.mxu0 0.0
    %392 = vmatpush1.msra.mxu0 0.0
    %393 = vmatprep.subr.mxu0 0.0
    %394 = vmatpush1.msra.mxu0 0.0
    %395 = vmatprep.subr.mxu0 0.0
    %396 = vmatpush1.msra.mxu0 0.0
    %397 = vmatprep.subr.mxu0 0.0
    %398 = vmatpush1.msra.mxu0 0.0
    %399 = vmatprep.subr.mxu0 0.0
    %400 = vmatpush1.msra.mxu0 0.0
    %401 = vmatprep.subr.mxu0 0.0
    %402 = vmatpush1.msra.mxu0 0.0
    %403 = vmatprep.subr.mxu0 0.0
    %404 = vmatpush1.msra.mxu0 0.0
    %405 = vmatprep.subr.mxu0 0.0
    %406 = vmatpush1.msra.mxu0 0.0
    %407 = vmatprep.subr.mxu0 0.0
    %408 = vmatpush1.msra.mxu0 0.0
    %409 = vmatprep.subr.mxu0 0.0
    %410 = vmatpush1.msra.mxu0 0.0
    %411 = vmatprep.mubr.f32.mxu0 0.0
    %412 = vmatmul.mubr.f32.gmra.mrb[0].mxu0 %v345
    %v413 = vpop.f32.mrb[0].mxu0
    %v414 = vadd.f32 %v342, %v413
    %v415 = vpop.f32.mrb[0].mxu0
    %416 = vdwg.mxu0
    %v417 = vld [vmem:[#allocation16] sm:$0xff]
    %v418 = vld [vmem:[#allocation16 + $0x8] sm:$0xff]
    %v419 = vld [vmem:[#allocation16 + $0x10] sm:$0xff]
    %v420 = vld [vmem:[#allocation16 + $0x18] sm:$0xff]
    %v421 = vld [vmem:[#allocation17] sm:$0x1]
    %v423 = vlaneseq
    %v424 = vshrl.u32 %v423, 7
    %v425 = vsub.s32 0, %v424
    %v426 = vrot.slane %v421, %v425
    %v429 = vsel %vm251, %v239, 0
    %431 = vmatprep.subr.mxu0 0.0
    %432 = vmatpush1.msra.mxu0 %v417
    %433 = vmatprep.subr.mxu0 0.0
    %434 = vmatpush1.msra.mxu0 %v418
    %435 = vmatprep.subr.mxu0 0.0
    %436 = vmatpush1.msra.mxu0 %v419
    %437 = vmatprep.subr.mxu0 0.0
    %438 = vmatpush1.msra.mxu0 %v420
    %439 = vmatprep.subr.mxu0 0.0
    %440 = vmatpush1.msra.mxu0 0.0
    %441 = vmatprep.subr.mxu0 0.0
    %442 = vmatpush1.msra.mxu0 0.0
    %443 = vmatprep.subr.mxu0 0.0
    %444 = vmatpush1.msra.mxu0 0.0
    %445 = vmatprep.subr.mxu0 0.0
    %446 = vmatpush1.msra.mxu0 0.0
    %447 = vmatprep.subr.mxu0 0.0
    %448 = vmatpush1.msra.mxu0 0.0
    %449 = vmatprep.subr.mxu0 0.0
    %450 = vmatpush1.msra.mxu0 0.0
    %451 = vmatprep.subr.mxu0 0.0
    %452 = vmatpush1.msra.mxu0 0.0
    %453 = vmatprep.subr.mxu0 0.0
    %454 = vmatpush1.msra.mxu0 0.0
    %455 = vmatprep.subr.mxu0 0.0
    %456 = vmatpush1.msra.mxu0 0.0
    %457 = vmatprep.subr.mxu0 0.0
    %458 = vmatpush1.msra.mxu0 0.0
    %459 = vmatprep.subr.mxu0 0.0
    %460 = vmatpush1.msra.mxu0 0.0
    %461 = vmatprep.subr.mxu0 0.0
    %462 = vmatpush1.msra.mxu0 0.0
    %463 = vmatprep.subr.mxu0 0.0
    %464 = vmatpush1.msra.mxu0 0.0
    %465 = vmatprep.subr.mxu0 0.0
    %466 = vmatpush1.msra.mxu0 0.0
    %467 = vmatprep.subr.mxu0 0.0
    %468 = vmatpush1.msra.mxu0 0.0
    %469 = vmatprep.subr.mxu0 0.0
    %470 = vmatpush1.msra.mxu0 0.0
    %471 = vmatprep.subr.mxu0 0.0
    %472 = vmatpush1.msra.mxu0 0.0
    %473 = vmatprep.subr.mxu0 0.0
    %474 = vmatpush1.msra.mxu0 0.0
    %475 = vmatprep.subr.mxu0 0.0
    %476 = vmatpush1.msra.mxu0 0.0
    %477 = vmatprep.subr.mxu0 0.0
    %478 = vmatpush1.msra.mxu0 0.0
    %479 = vmatprep.subr.mxu0 0.0
    %480 = vmatpush1.msra.mxu0 0.0
    %481 = vmatprep.subr.mxu0 0.0
    %482 = vmatpush1.msra.mxu0 0.0
    %483 = vmatprep.subr.mxu0 0.0
    %484 = vmatpush1.msra.mxu0 0.0
    %485 = vmatprep.subr.mxu0 0.0
    %486 = vmatpush1.msra.mxu0 0.0
    %487 = vmatprep.subr.mxu0 0.0
    %488 = vmatpush1.msra.mxu0 0.0
    %489 = vmatprep.subr.mxu0 0.0
    %490 = vmatpush1.msra.mxu0 0.0
    %491 = vmatprep.subr.mxu0 0.0
    %492 = vmatpush1.msra.mxu0 0.0
    %493 = vmatprep.subr.mxu0 0.0
    %494 = vmatpush1.msra.mxu0 0.0
    %495 = vmatprep.mubr.f32.mxu0 0.0
    %496 = vmatmul.mubr.f32.gmra.mrb[0].mxu0 %v429
    %v497 = vpop.f32.mrb[0].mxu0
    %v498 = vadd.f32 %v426, %v497
    %v499 = vpop.f32.mrb[0].mxu0
    %500 = vdwg.mxu0
    %v503 = vunpack.c.l.s4 1966171168
    %v504 = vunpack.c.0.s8 %v503
    %v505 = vlaneseq
    %v506 = vshrl.u32 %v505, 7
    %v507 = vsub.s32 %v504, %v506
    %v508 = vrot.slane %v414, %v507
    %v509 = vcombine.high %v508, %v508
    %v511 = vunpack.c.l.s4 1966171168
    %v512 = vunpack.c.0.s8 %v511
    %v513 = vlaneseq
    %v514 = vshrl.u32 %v513, 7
    %v515 = vsub.s32 %v512, %v514
    %v516 = vrot.slane %v508, %v515
    %v518 = vunpack.c.l.s4 1966171168
    %v519 = vunpack.c.0.s8 %v518
    %v520 = vlaneseq
    %v521 = vshrl.u32 %v520, 7
    %v522 = vsub.s32 %v519, %v521
    %v523 = vrot.slane %v509, %v522
    %v524 = vlaneseq
    %v525 = vshrl.u32 %v524, 7
    %v526 = vsub.s32 0, %v525
    %v527 = vrot.slane %v516, %v526
    %v528 = vlaneseq
    %v529 = vshrl.u32 %v528, 7
    %v530 = vsub.s32 0, %v529
    %v531 = vrot.slane %v523, %v530
    %v534 = vadd.f32 %v325, %v527
    %v535 = vadd.f32 %v330, %v531
    %v538 = vunpack.c.l.s4 1966171168
    %v539 = vunpack.c.0.s8 %v538
    %v540 = vlaneseq
    %v541 = vshrl.u32 %v540, 7
    %v542 = vsub.s32 %v539, %v541
    %v543 = vrot.slane %v498, %v542
    %v544 = vcombine.high %v543, %v543
    %v546 = vunpack.c.l.s4 1966171168
    %v547 = vunpack.c.0.s8 %v546
    %v548 = vlaneseq
    %v549 = vshrl.u32 %v548, 7
    %v550 = vsub.s32 %v547, %v549
    %v551 = vrot.slane %v543, %v550
    %v553 = vunpack.c.l.s4 1966171168
    %v554 = vunpack.c.0.s8 %v553
    %v555 = vlaneseq
    %v556 = vshrl.u32 %v555, 7
    %v557 = vsub.s32 %v554, %v556
    %v558 = vrot.slane %v544, %v557
    %v559 = vlaneseq
    %v560 = vshrl.u32 %v559, 7
    %v561 = vsub.s32 0, %v560
    %v562 = vrot.slane %v551, %v561
    %v563 = vlaneseq
    %v564 = vshrl.u32 %v563, 7
    %v565 = vsub.s32 0, %v564
    %v566 = vrot.slane %v558, %v565
    %v569 = vadd.f32 %v534, %v562
    %v570 = vadd.f32 %v535, %v566
    %v571 = vxor.u32 %v569, 2147483648
    %v572 = vxor.u32 %v570, 2147483648
    %v573 = vmul.f32 %v571, 1.442695
    %v574 = vpow.pop %v573
    %v575 = vmul.f32 %v572, 1.442695
    %v576 = vpow.pop %v575
    %v577 = vadd.f32 %v574, 1.0
    %v578 = vadd.f32 %v576, 1.0
    %v579 = vrcp.pop %v577
    %v580 = vmul.f32 1.0, %v579
    %v581 = vrcp.pop %v578
    %v582 = vmul.f32 1.0, %v581
    %v583 = vld [vmem:[#allocation19] sm:$0x1]
    %v585 = vsel %vm251, %v583, 0
    %v588 = vsel %vm251, %v580, 0
    %590 = vmatprep.subr.mxu0 0.0
    %591 = vmatpush1.xpose.msra.mxu0 %v588
    %592 = vmatprep.subr.mxu0 0.0
    %593 = vmatpush1.xpose.msra.mxu0 0.0
    %594 = vmatprep.subr.mxu0 0.0
    %595 = vmatpush1.xpose.msra.mxu0 0.0
    %596 = vmatprep.subr.mxu0 0.0
    %597 = vmatpush1.xpose.msra.mxu0 0.0
    %598 = vmatprep.subr.mxu0 0.0
    %599 = vmatpush1.xpose.msra.mxu0 0.0
    %600 = vmatprep.subr.mxu0 0.0
    %601 = vmatpush1.xpose.msra.mxu0 0.0
    %602 = vmatprep.subr.mxu0 0.0
    %603 = vmatpush1.xpose.msra.mxu0 0.0
    %604 = vmatprep.subr.mxu0 0.0
    %605 = vmatpush1.xpose.msra.mxu0 0.0
    %606 = vmatprep.subr.mxu0 0.0
    %607 = vmatpush1.xpose.msra.mxu0 0.0
    %608 = vmatprep.subr.mxu0 0.0
    %609 = vmatpush1.xpose.msra.mxu0 0.0
    %610 = vmatprep.subr.mxu0 0.0
    %611 = vmatpush1.xpose.msra.mxu0 0.0
    %612 = vmatprep.subr.mxu0 0.0
    %613 = vmatpush1.xpose.msra.mxu0 0.0
    %614 = vmatprep.subr.mxu0 0.0
    %615 = vmatpush1.xpose.msra.mxu0 0.0
    %616 = vmatprep.subr.mxu0 0.0
    %617 = vmatpush1.xpose.msra.mxu0 0.0
    %618 = vmatprep.subr.mxu0 0.0
    %619 = vmatpush1.xpose.msra.mxu0 0.0
    %620 = vmatprep.subr.mxu0 0.0
    %621 = vmatpush1.xpose.msra.mxu0 0.0
    %622 = vmatprep.subr.mxu0 0.0
    %623 = vmatpush1.xpose.msra.mxu0 0.0
    %624 = vmatprep.subr.mxu0 0.0
    %625 = vmatpush1.xpose.msra.mxu0 0.0
    %626 = vmatprep.subr.mxu0 0.0
    %627 = vmatpush1.xpose.msra.mxu0 0.0
    %628 = vmatprep.subr.mxu0 0.0
    %629 = vmatpush1.xpose.msra.mxu0 0.0
    %630 = vmatprep.subr.mxu0 0.0
    %631 = vmatpush1.xpose.msra.mxu0 0.0
    %632 = vmatprep.subr.mxu0 0.0
    %633 = vmatpush1.xpose.msra.mxu0 0.0
    %634 = vmatprep.subr.mxu0 0.0
    %635 = vmatpush1.xpose.msra.mxu0 0.0
    %636 = vmatprep.subr.mxu0 0.0
    %637 = vmatpush1.xpose.msra.mxu0 0.0
    %638 = vmatprep.subr.mxu0 0.0
    %639 = vmatpush1.xpose.msra.mxu0 0.0
    %640 = vmatprep.subr.mxu0 0.0
    %641 = vmatpush1.xpose.msra.mxu0 0.0
    %642 = vmatprep.subr.mxu0 0.0
    %643 = vmatpush1.xpose.msra.mxu0 0.0
    %644 = vmatprep.subr.mxu0 0.0
    %645 = vmatpush1.xpose.msra.mxu0 0.0
    %646 = vmatprep.subr.mxu0 0.0
    %647 = vmatpush1.xpose.msra.mxu0 0.0
    %648 = vmatprep.subr.mxu0 0.0
    %649 = vmatpush1.xpose.msra.mxu0 0.0
    %650 = vmatprep.subr.mxu0 0.0
    %651 = vmatpush1.xpose.msra.mxu0 0.0
    %652 = vmatprep.subr.mxu0 0.0
    %653 = vmatpush1.xpose.msra.mxu0 0.0
    %654 = vmatprep.mubr.f32.mxu0 0.0
    %655 = vmatmul.mubr.f32.gmra.mrb[0].mxu0 %v585
    %v656 = vpop.f32.mrb[0].mxu0
    %v657 = vadd.f32 0.0, %v656
    %v658 = vpop.f32.mrb[0].mxu0
    %659 = vdwg.mxu0
    %v661 = vsel %vm251, %v582, 0
    %663 = vmatprep.subr.mxu0 0.0
    %664 = vmatpush1.xpose.msra.mxu0 %v661
    %665 = vmatprep.subr.mxu0 0.0
    %666 = vmatpush1.xpose.msra.mxu0 0.0
    %667 = vmatprep.subr.mxu0 0.0
    %668 = vmatpush1.xpose.msra.mxu0 0.0
    %669 = vmatprep.subr.mxu0 0.0
    %670 = vmatpush1.xpose.msra.mxu0 0.0
    %671 = vmatprep.subr.mxu0 0.0
    %672 = vmatpush1.xpose.msra.mxu0 0.0
    %673 = vmatprep.subr.mxu0 0.0
    %674 = vmatpush1.xpose.msra.mxu0 0.0
    %675 = vmatprep.subr.mxu0 0.0
    %676 = vmatpush1.xpose.msra.mxu0 0.0
    %677 = vmatprep.subr.mxu0 0.0
    %678 = vmatpush1.xpose.msra.mxu0 0.0
    %679 = vmatprep.subr.mxu0 0.0
    %680 = vmatpush1.xpose.msra.mxu0 0.0
    %681 = vmatprep.subr.mxu0 0.0
    %682 = vmatpush1.xpose.msra.mxu0 0.0
    %683 = vmatprep.subr.mxu0 0.0
    %684 = vmatpush1.xpose.msra.mxu0 0.0
    %685 = vmatprep.subr.mxu0 0.0
    %686 = vmatpush1.xpose.msra.mxu0 0.0
    %687 = vmatprep.subr.mxu0 0.0
    %688 = vmatpush1.xpose.msra.mxu0 0.0
    %689 = vmatprep.subr.mxu0 0.0
    %690 = vmatpush1.xpose.msra.mxu0 0.0
    %691 = vmatprep.subr.mxu0 0.0
    %692 = vmatpush1.xpose.msra.mxu0 0.0
    %693 = vmatprep.subr.mxu0 0.0
    %694 = vmatpush1.xpose.msra.mxu0 0.0
    %695 = vmatprep.subr.mxu0 0.0
    %696 = vmatpush1.xpose.msra.mxu0 0.0
    %697 = vmatprep.subr.mxu0 0.0
    %698 = vmatpush1.xpose.msra.mxu0 0.0
    %699 = vmatprep.subr.mxu0 0.0
    %700 = vmatpush1.xpose.msra.mxu0 0.0
    %701 = vmatprep.subr.mxu0 0.0
    %702 = vmatpush1.xpose.msra.mxu0 0.0
    %703 = vmatprep.subr.mxu0 0.0
    %704 = vmatpush1.xpose.msra.mxu0 0.0
    %705 = vmatprep.subr.mxu0 0.0
    %706 = vmatpush1.xpose.msra.mxu0 0.0
    %707 = vmatprep.subr.mxu0 0.0
    %708 = vmatpush1.xpose.msra.mxu0 0.0
    %709 = vmatprep.subr.mxu0 0.0
    %710 = vmatpush1.xpose.msra.mxu0 0.0
    %711 = vmatprep.subr.mxu0 0.0
    %712 = vmatpush1.xpose.msra.mxu0 0.0
    %713 = vmatprep.subr.mxu0 0.0
    %714 = vmatpush1.xpose.msra.mxu0 0.0
    %715 = vmatprep.subr.mxu0 0.0
    %716 = vmatpush1.xpose.msra.mxu0 0.0
    %717 = vmatprep.subr.mxu0 0.0
    %718 = vmatpush1.xpose.msra.mxu0 0.0
    %719 = vmatprep.subr.mxu0 0.0
    %720 = vmatpush1.xpose.msra.mxu0 0.0
    %721 = vmatprep.subr.mxu0 0.0
    %722 = vmatpush1.xpose.msra.mxu0 0.0
    %723 = vmatprep.subr.mxu0 0.0
    %724 = vmatpush1.xpose.msra.mxu0 0.0
    %725 = vmatprep.subr.mxu0 0.0
    %726 = vmatpush1.xpose.msra.mxu0 0.0
    %727 = vmatprep.mubr.f32.mxu0 0.0
    %728 = vmatmul.mubr.f32.gmra.mrb[0].mxu0 %v585
    %v729 = vpop.f32.mrb[0].mxu0
    %v730 = vadd.f32 0.0, %v729
    %v731 = vpop.f32.mrb[0].mxu0
    %732 = vdwg.mxu0
    %v733 = vld [vmem:[#allocation2] sm:$0x3]
    %v736 = vunpack.c.l.s4 1966171168
    %v737 = vunpack.c.0.s8 %v736
    %v738 = vlaneseq
    %v739 = vshrl.u32 %v738, 7
    %v740 = vsub.s32 %v737, %v739
    %v741 = vrot.slane %v733, %v740
    %v742 = vcombine.high %v741, %v741
    %v744 = vunpack.c.l.s4 1966171168
    %v745 = vunpack.c.0.s8 %v744
    %v746 = vlaneseq
    %v747 = vshrl.u32 %v746, 7
    %v748 = vsub.s32 %v745, %v747
    %v749 = vrot.slane %v741, %v748
    %v751 = vunpack.c.l.s4 1966171168
    %v752 = vunpack.c.0.s8 %v751
    %v753 = vlaneseq
    %v754 = vshrl.u32 %v753, 7
    %v755 = vsub.s32 %v752, %v754
    %v756 = vrot.slane %v742, %v755
    %v759 = vmul.f32 %v657, %v749
    %v760 = vmul.f32 %v730, %v756
    %vm761 = vcmask 64512
    %v763 = vsel %vm761, %v759, 0
    %765 = vmatprep.subr.mxu0 0.0
    %766 = vmatpush1.msra.mxu0 %v236
    %767 = vmatprep.subr.mxu0 0.0
    %768 = vmatpush1.msra.mxu0 0.0
    %769 = vmatprep.subr.mxu0 0.0
    %770 = vmatpush1.msra.mxu0 0.0
    %771 = vmatprep.subr.mxu0 0.0
    %772 = vmatpush1.msra.mxu0 0.0
    %773 = vmatprep.subr.mxu0 0.0
    %774 = vmatpush1.msra.mxu0 0.0
    %775 = vmatprep.subr.mxu0 0.0
    %776 = vmatpush1.msra.mxu0 0.0
    %777 = vmatprep.subr.mxu0 0.0
    %778 = vmatpush1.msra.mxu0 0.0
    %779 = vmatprep.subr.mxu0 0.0
    %780 = vmatpush1.msra.mxu0 0.0
    %781 = vmatprep.subr.mxu0 0.0
    %782 = vmatpush1.msra.mxu0 0.0
    %783 = vmatprep.subr.mxu0 0.0
    %784 = vmatpush1.msra.mxu0 0.0
    %785 = vmatprep.subr.mxu0 0.0
    %786 = vmatpush1.msra.mxu0 0.0
    %787 = vmatprep.subr.mxu0 0.0
    %788 = vmatpush1.msra.mxu0 0.0
    %789 = vmatprep.subr.mxu0 0.0
    %790 = vmatpush1.msra.mxu0 0.0
    %791 = vmatprep.subr.mxu0 0.0
    %792 = vmatpush1.msra.mxu0 0.0
    %793 = vmatprep.subr.mxu0 0.0
    %794 = vmatpush1.msra.mxu0 0.0
    %795 = vmatprep.subr.mxu0 0.0
    %796 = vmatpush1.msra.mxu0 0.0
    %797 = vmatprep.subr.mxu0 0.0
    %798 = vmatpush1.msra.mxu0 0.0
    %799 = vmatprep.subr.mxu0 0.0
    %800 = vmatpush1.msra.mxu0 0.0
    %801 = vmatprep.subr.mxu0 0.0
    %802 = vmatpush1.msra.mxu0 0.0
    %803 = vmatprep.subr.mxu0 0.0
    %804 = vmatpush1.msra.mxu0 0.0
    %805 = vmatprep.subr.mxu0 0.0
    %806 = vmatpush1.msra.mxu0 0.0
    %807 = vmatprep.subr.mxu0 0.0
    %808 = vmatpush1.msra.mxu0 0.0
    %809 = vmatprep.subr.mxu0 0.0
    %810 = vmatpush1.msra.mxu0 0.0
    %811 = vmatprep.subr.mxu0 0.0
    %812 = vmatpush1.msra.mxu0 0.0
    %813 = vmatprep.subr.mxu0 0.0
    %814 = vmatpush1.msra.mxu0 0.0
    %815 = vmatprep.subr.mxu0 0.0
    %816 = vmatpush1.msra.mxu0 0.0
    %817 = vmatprep.subr.mxu0 0.0
    %818 = vmatpush1.msra.mxu0 0.0
    %819 = vmatprep.subr.mxu0 0.0
    %820 = vmatpush1.msra.mxu0 0.0
    %821 = vmatprep.subr.mxu0 0.0
    %822 = vmatpush1.msra.mxu0 0.0
    %823 = vmatprep.subr.mxu0 0.0
    %824 = vmatpush1.msra.mxu0 0.0
    %825 = vmatprep.subr.mxu0 0.0
    %826 = vmatpush1.msra.mxu0 0.0
    %827 = vmatprep.subr.mxu0 0.0
    %828 = vmatpush1.msra.mxu0 0.0
    %829 = vmatprep.mubr.f32.mxu0 0.0
    %830 = vmatmul.mubr.f32.gmra.mrb[0].mxu0 %v763
    %v831 = vpop.f32.mrb[0].mxu0
    %v832 = vadd.f32 0.0, %v831
    %v833 = vpop.f32.mrb[0].mxu0
    %834 = vdwg.mxu0
    %v836 = vsel %vm761, %v760, 0
    %838 = vmatprep.subr.mxu0 0.0
    %839 = vmatpush1.msra.mxu0 %v237
    %840 = vmatprep.subr.mxu0 0.0
    %841 = vmatpush1.msra.mxu0 0.0
    %842 = vmatprep.subr.mxu0 0.0
    %843 = vmatpush1.msra.mxu0 0.0
    %844 = vmatprep.subr.mxu0 0.0
    %845 = vmatpush1.msra.mxu0 0.0
    %846 = vmatprep.subr.mxu0 0.0
    %847 = vmatpush1.msra.mxu0 0.0
    %848 = vmatprep.subr.mxu0 0.0
    %849 = vmatpush1.msra.mxu0 0.0
    %850 = vmatprep.subr.mxu0 0.0
    %851 = vmatpush1.msra.mxu0 0.0
    %852 = vmatprep.subr.mxu0 0.0
    %853 = vmatpush1.msra.mxu0 0.0
    %854 = vmatprep.subr.mxu0 0.0
    %855 = vmatpush1.msra.mxu0 0.0
    %856 = vmatprep.subr.mxu0 0.0
    %857 = vmatpush1.msra.mxu0 0.0
    %858 = vmatprep.subr.mxu0 0.0
    %859 = vmatpush1.msra.mxu0 0.0
    %860 = vmatprep.subr.mxu0 0.0
    %861 = vmatpush1.msra.mxu0 0.0
    %862 = vmatprep.subr.mxu0 0.0
    %863 = vmatpush1.msra.mxu0 0.0
    %864 = vmatprep.subr.mxu0 0.0
    %865 = vmatpush1.msra.mxu0 0.0
    %866 = vmatprep.subr.mxu0 0.0
    %867 = vmatpush1.msra.mxu0 0.0
    %868 = vmatprep.subr.mxu0 0.0
    %869 = vmatpush1.msra.mxu0 0.0
    %870 = vmatprep.subr.mxu0 0.0
    %871 = vmatpush1.msra.mxu0 0.0
    %872 = vmatprep.subr.mxu0 0.0
    %873 = vmatpush1.msra.mxu0 0.0
    %874 = vmatprep.subr.mxu0 0.0
    %875 = vmatpush1.msra.mxu0 0.0
    %876 = vmatprep.subr.mxu0 0.0
    %877 = vmatpush1.msra.mxu0 0.0
    %878 = vmatprep.subr.mxu0 0.0
    %879 = vmatpush1.msra.mxu0 0.0
    %880 = vmatprep.subr.mxu0 0.0
    %881 = vmatpush1.msra.mxu0 0.0
    %882 = vmatprep.subr.mxu0 0.0
    %883 = vmatpush1.msra.mxu0 0.0
    %884 = vmatprep.subr.mxu0 0.0
    %885 = vmatpush1.msra.mxu0 0.0
    %886 = vmatprep.subr.mxu0 0.0
    %887 = vmatpush1.msra.mxu0 0.0
    %888 = vmatprep.subr.mxu0 0.0
    %889 = vmatpush1.msra.mxu0 0.0
    %890 = vmatprep.subr.mxu0 0.0
    %891 = vmatpush1.msra.mxu0 0.0
    %892 = vmatprep.subr.mxu0 0.0
    %893 = vmatpush1.msra.mxu0 0.0
    %894 = vmatprep.subr.mxu0 0.0
    %895 = vmatpush1.msra.mxu0 0.0
    %896 = vmatprep.subr.mxu0 0.0
    %897 = vmatpush1.msra.mxu0 0.0
    %898 = vmatprep.subr.mxu0 0.0
    %899 = vmatpush1.msra.mxu0 0.0
    %900 = vmatprep.subr.mxu0 0.0
    %901 = vmatpush1.msra.mxu0 0.0
    %902 = vmatprep.mubr.f32.mxu0 0.0
    %903 = vmatmul.mubr.f32.gmra.mrb[0].mxu0 %v836
    %v904 = vpop.f32.mrb[0].mxu0
    %v905 = vadd.f32 0.0, %v904
    %v906 = vpop.f32.mrb[0].mxu0
    %907 = vdwg.mxu0
    %v908 = vld [vmem:[#allocation20] sm:$0xff]
    %v909 = vld [vmem:[#allocation20 + $0x8] sm:$0xff]
    %v910 = vld [vmem:[#allocation20 + $0x10] sm:$0xff]
    %v911 = vld [vmem:[#allocation20 + $0x18] sm:$0xff]
    %v912 = vld [vmem:[#allocation22] sm:$0x1]
    %v914 = vlaneseq
    %v915 = vshrl.u32 %v914, 7
    %v916 = vsub.s32 0, %v915
    %v917 = vrot.slane %v912, %v916
    %v921 = vrot.slane %v905, 7
    %vm922 = vcmask 1041409
    %v923 = vsel %vm922, %v921, %v832
    %v924 = vsel %vm251, %v923, 0
    %926 = vmatprep.subr.mxu0 0.0
    %927 = vmatpush1.msra.mxu0 %v908
    %928 = vmatprep.subr.mxu0 0.0
    %929 = vmatpush1.msra.mxu0 %v909
    %930 = vmatprep.subr.mxu0 0.0
    %931 = vmatpush1.msra.mxu0 %v910
    %932 = vmatprep.subr.mxu0 0.0
    %933 = vmatpush1.msra.mxu0 %v911
    %934 = vmatprep.subr.mxu0 0.0
    %935 = vmatpush1.msra.mxu0 0.0
    %936 = vmatprep.subr.mxu0 0.0
    %937 = vmatpush1.msra.mxu0 0.0
    %938 = vmatprep.subr.mxu0 0.0
    %939 = vmatpush1.msra.mxu0 0.0
    %940 = vmatprep.subr.mxu0 0.0
    %941 = vmatpush1.msra.mxu0 0.0
    %942 = vmatprep.subr.mxu0 0.0
    %943 = vmatpush1.msra.mxu0 0.0
    %944 = vmatprep.subr.mxu0 0.0
    %945 = vmatpush1.msra.mxu0 0.0
    %946 = vmatprep.subr.mxu0 0.0
    %947 = vmatpush1.msra.mxu0 0.0
    %948 = vmatprep.subr.mxu0 0.0
    %949 = vmatpush1.msra.mxu0 0.0
    %950 = vmatprep.subr.mxu0 0.0
    %951 = vmatpush1.msra.mxu0 0.0
    %952 = vmatprep.subr.mxu0 0.0
    %953 = vmatpush1.msra.mxu0 0.0
    %954 = vmatprep.subr.mxu0 0.0
    %955 = vmatpush1.msra.mxu0 0.0
    %956 = vmatprep.subr.mxu0 0.0
    %957 = vmatpush1.msra.mxu0 0.0
    %958 = vmatprep.subr.mxu0 0.0
    %959 = vmatpush1.msra.mxu0 0.0
    %960 = vmatprep.subr.mxu0 0.0
    %961 = vmatpush1.msra.mxu0 0.0
    %962 = vmatprep.subr.mxu0 0.0
    %963 = vmatpush1.msra.mxu0 0.0
    %964 = vmatprep.subr.mxu0 0.0
    %965 = vmatpush1.msra.mxu0 0.0
    %966 = vmatprep.subr.mxu0 0.0
    %967 = vmatpush1.msra.mxu0 0.0
    %968 = vmatprep.subr.mxu0 0.0
    %969 = vmatpush1.msra.mxu0 0.0
    %970 = vmatprep.subr.mxu0 0.0
    %971 = vmatpush1.msra.mxu0 0.0
    %972 = vmatprep.subr.mxu0 0.0
    %973 = vmatpush1.msra.mxu0 0.0
    %974 = vmatprep.subr.mxu0 0.0
    %975 = vmatpush1.msra.mxu0 0.0
    %976 = vmatprep.subr.mxu0 0.0
    %977 = vmatpush1.msra.mxu0 0.0
    %978 = vmatprep.subr.mxu0 0.0
    %979 = vmatpush1.msra.mxu0 0.0
    %980 = vmatprep.subr.mxu0 0.0
    %981 = vmatpush1.msra.mxu0 0.0
    %982 = vmatprep.subr.mxu0 0.0
    %983 = vmatpush1.msra.mxu0 0.0
    %984 = vmatprep.subr.mxu0 0.0
    %985 = vmatpush1.msra.mxu0 0.0
    %986 = vmatprep.subr.mxu0 0.0
    %987 = vmatpush1.msra.mxu0 0.0
    %988 = vmatprep.subr.mxu0 0.0
    %989 = vmatpush1.msra.mxu0 0.0
    %990 = vmatprep.mubr.f32.mxu0 0.0
    %991 = vmatmul.mubr.f32.gmra.mrb[0].mxu0 %v924
    %v992 = vpop.f32.mrb[0].mxu0
    %v993 = vadd.f32 %v917, %v992
    %v994 = vpop.f32.mrb[0].mxu0
    %995 = vdwg.mxu0
    %996 = vrot.lane.b32.xlu0 %v414, 96
    %v997 = vpop.permute.xlu0 %996
    %v999 = vmax.f32 %v993, %v997
    %1000 = vrot.lane.b32.xlu0 %v498, 96
    %v1001 = vpop.permute.xlu0 %1000
    %v1003 = vmax.f32 %v999, %v1001
    %v1004 = vsub.f32 %v993, %v1003
    %v1005 = vmul.f32 %v1004, 1.442695
    %v1006 = vpow.pop %v1005
    %1008 = vrot.lane.b32.xlu0 %v1003, 32
    %v1009 = vpop.permute.xlu0 %1008
    %v1011 = vsub.f32 %v414, %v1009
    %v1012 = vmul.f32 %v1011, 1.442695
    %v1013 = vpow.pop %v1012
    %v1014 = vsub.f32 %v498, %v1009
    %v1015 = vmul.f32 %v1014, 1.442695
    %v1016 = vpow.pop %v1015
    %1018 = vrot.lane.b32.xlu0 %v1013, 96
    %v1019 = vpop.permute.xlu0 %1018
    %v1021 = vadd.f32 %v1006, %v1019
    %1023 = vrot.lane.b32.xlu0 %v1016, 96
    %v1024 = vpop.permute.xlu0 %1023
    %v1026 = vadd.f32 %v1021, %v1024
    %v1027 = vrcp.pop %v1026
    %v1028 = vmul.f32 %v1006, %v993
    %v1029 = vmul.f32 %v1013, %v414
    %1031 = vrot.lane.b32.xlu0 %v1029, 96
    %v1032 = vpop.permute.xlu0 %1031
    %v1034 = vadd.f32 %v1028, %v1032
    %v1035 = vmul.f32 %v1016, %v498
    %1037 = vrot.lane.b32.xlu0 %v1035, 96
    %v1038 = vpop.permute.xlu0 %1037
    %v1040 = vadd.f32 %v1034, %v1038
    %v1041 = vmul.f32 %v1040, %v1027
    %v1042 = vld [vmem:[#allocation23] sm:$0xff]
    %v1043 = vld [vmem:[#allocation23 + $0x8] sm:$0xff]
    %v1044 = vld [vmem:[#allocation23 + $0x10] sm:$0xff]
    %v1045 = vld [vmem:[#allocation23 + $0x18] sm:$0xff]
    %v1046 = vld [vmem:[#allocation25] sm:$0x1]
    %v1048 = vlaneseq
    %v1049 = vshrl.u32 %v1048, 7
    %v1050 = vsub.s32 0, %v1049
    %v1051 = vrot.slane %v1046, %v1050
    %v1054 = vsel %vm251, %v1041, 0
    %1056 = vmatprep.subr.mxu0 0.0
    %1057 = vmatpush1.msra.mxu0 %v1042
    %1058 = vmatprep.subr.mxu0 0.0
    %1059 = vmatpush1.msra.mxu0 %v1043
    %1060 = vmatprep.subr.mxu0 0.0
    %1061 = vmatpush1.msra.mxu0 %v1044
    %1062 = vmatprep.subr.mxu0 0.0
    %1063 = vmatpush1.msra.mxu0 %v1045
    %1064 = vmatprep.subr.mxu0 0.0
    %1065 = vmatpush1.msra.mxu0 0.0
    %1066 = vmatprep.subr.mxu0 0.0
    %1067 = vmatpush1.msra.mxu0 0.0
    %1068 = vmatprep.subr.mxu0 0.0
    %1069 = vmatpush1.msra.mxu0 0.0
    %1070 = vmatprep.subr.mxu0 0.0
    %1071 = vmatpush1.msra.mxu0 0.0
    %1072 = vmatprep.subr.mxu0 0.0
    %1073 = vmatpush1.msra.mxu0 0.0
    %1074 = vmatprep.subr.mxu0 0.0
    %1075 = vmatpush1.msra.mxu0 0.0
    %1076 = vmatprep.subr.mxu0 0.0
    %1077 = vmatpush1.msra.mxu0 0.0
    %1078 = vmatprep.subr.mxu0 0.0
    %1079 = vmatpush1.msra.mxu0 0.0
    %1080 = vmatprep.subr.mxu0 0.0
    %1081 = vmatpush1.msra.mxu0 0.0
    %1082 = vmatprep.subr.mxu0 0.0
    %1083 = vmatpush1.msra.mxu0 0.0
    %1084 = vmatprep.subr.mxu0 0.0
    %1085 = vmatpush1.msra.mxu0 0.0
    %1086 = vmatprep.subr.mxu0 0.0
    %1087 = vmatpush1.msra.mxu0 0.0
    %1088 = vmatprep.subr.mxu0 0.0
    %1089 = vmatpush1.msra.mxu0 0.0
    %1090 = vmatprep.subr.mxu0 0.0
    %1091 = vmatpush1.msra.mxu0 0.0
    %1092 = vmatprep.subr.mxu0 0.0
    %1093 = vmatpush1.msra.mxu0 0.0
    %1094 = vmatprep.subr.mxu0 0.0
    %1095 = vmatpush1.msra.mxu0 0.0
    %1096 = vmatprep.subr.mxu0 0.0
    %1097 = vmatpush1.msra.mxu0 0.0
    %1098 = vmatprep.subr.mxu0 0.0
    %1099 = vmatpush1.msra.mxu0 0.0
    %1100 = vmatprep.subr.mxu0 0.0
    %1101 = vmatpush1.msra.mxu0 0.0
    %1102 = vmatprep.subr.mxu0 0.0
    %1103 = vmatpush1.msra.mxu0 0.0
    %1104 = vmatprep.subr.mxu0 0.0
    %1105 = vmatpush1.msra.mxu0 0.0
    %1106 = vmatprep.subr.mxu0 0.0
    %1107 = vmatpush1.msra.mxu0 0.0
    %1108 = vmatprep.subr.mxu0 0.0
    %1109 = vmatpush1.msra.mxu0 0.0
    %1110 = vmatprep.subr.mxu0 0.0
    %1111 = vmatpush1.msra.mxu0 0.0
    %1112 = vmatprep.subr.mxu0 0.0
    %1113 = vmatpush1.msra.mxu0 0.0
    %1114 = vmatprep.subr.mxu0 0.0
    %1115 = vmatpush1.msra.mxu0 0.0
    %1116 = vmatprep.subr.mxu0 0.0
    %1117 = vmatpush1.msra.mxu0 0.0
    %1118 = vmatprep.subr.mxu0 0.0
    %1119 = vmatpush1.msra.mxu0 0.0
    %1120 = vmatprep.mubr.f32.mxu0 0.0
    %1121 = vmatmul.mubr.f32.gmra.mrb[0].mxu0 %v1054
    %v1122 = vpop.f32.mrb[0].mxu0
    %v1123 = vadd.f32 %v1051, %v1122
    %v1124 = vpop.f32.mrb[0].mxu0
    %1125 = vdwg.mxu0
    %vm1126 = vcmask 254976
    %1127 = vst.msk [vmem:[#allocation26] sm:$0x3] %vm1126, %v1123
    // Predicated region
    $region122: #{tpu_custom_call.1} parent=1 // pred_check
      _
    $region123: #{tpu_custom_call.1} parent=1 // pred_check_branch
      %1129 = sbr.rel (0) target = $region125
    $region124: #{tpu_custom_call.1} parent=1 // pred_region
      %s1131 = ssub.s32 32, 32
      %1132 = vsyncadd [#allocation4], %s1131
      %s1134 = sshll.u32 [#allocation26], 4
      %s1135 = int_to_ptr.vmem [resolvable:$true] %s1134
      %1137 = dma.vmem_to_hbm [thread:$0]  %s1135, 32, %s15, [#allocation4]
    $region125: #{tpu_custom_call.1} parent=1 // pred_fallthru
      _
    // Predicated region
    $region126: #{tpu_custom_call.1} parent=1 // pred_check
      _
    $region127: #{tpu_custom_call.1} parent=1 // pred_check_branch
      %1139 = sbr.rel (0) target = $region129
    $region128: #{tpu_custom_call.1} parent=1 // pred_region
      %1140 = dma.done [#allocation4], 32
    $region129: #{tpu_custom_call.1} parent=1 // pred_fallthru
      _
    %1141 = vsyncpa [#allocation3], 1
    %1142 = vsyncpa [#allocation6], 1
    %1143 = vsyncpa [#allocation9], 1
    %1144 = vsyncpa [#allocation12], 1
    %1145 = vsyncpa [#allocation15], 1
    %1146 = vsyncpa [#allocation18], 1
    %1147 = vsyncpa [#allocation21], 1
    %1148 = vsyncpa [#allocation24], 1
    %1149 = vsyncpa [#allocation4], 1

</llo_original>
